<compile_context>
chip_gen: v5e
topology: v5e:2x2
jax: 0.10.0
libtpu: 0.0.40
codegen_flags: <defaults>
</compile_context>

<pallas_src>
import functools

import jax
import jax.numpy as jnp
from jax.experimental import pallas as pl
from jax.experimental.pallas import tpu as pltpu


def _round_up(x, m):
    return (x + m - 1) // m * m


# ----------------------------- Pallas kernel -------------------------------

def _matmul_bias_kernel(x_ref, w_ref, b_ref, o_ref, *, apply_relu):
    acc = jnp.dot(x_ref[...], w_ref[...], preferred_element_type=jnp.float32)
    acc = acc + b_ref[...]                     # (1, Np) broadcasts over rows
    if apply_relu:
        acc = jnp.maximum(acc, 0.0)
    o_ref[...] = acc.astype(o_ref.dtype)


def matmul_bias(x, w_pad, b_pad, *, apply_relu, block_m=512):
    """[M, K] @ pre-padded [Kp, Np] weights + bias, optional fused ReLU.

    Tiled over M (software-pipelined, "parallel" for megacore); weights and
    bias blocks are revisited (index_map -> (0, 0)) so they stay VMEM-resident.
    Kp/Np are multiples of 128 (lane-dense loads and stores). Returns f32
    [M, Np]; the caller strips padded output columns.
    """
    M, K = x.shape
    Kp, Np = w_pad.shape
    assert Kp % 128 == 0 and Np % 128 == 0 and Kp >= K

    tm = min(block_m, _round_up(M, 8))          # multiple of 8 sublanes
    Mp = _round_up(M, tm)

    x = x.astype(jnp.bfloat16)                  # MXU-friendly operands
    if Mp != M or Kp != K:
        x = jnp.pad(x, ((0, Mp - M), (0, Kp - K)))

    out = pl.pallas_call(
        functools.partial(_matmul_bias_kernel, apply_relu=apply_relu),
        out_shape=jax.ShapeDtypeStruct((Mp, Np), jnp.float32),
        grid=(pl.cdiv(Mp, tm),),
        in_specs=[
            pl.BlockSpec((tm, Kp), lambda i: (i, 0)),   # streamed row tile
            pl.BlockSpec((Kp, Np), lambda i: (0, 0)),   # resident weights
            pl.BlockSpec((1, Np), lambda i: (0, 0)),    # resident bias
        ],
        out_specs=pl.BlockSpec((tm, Np), lambda i: (i, 0)),
        compiler_params=pltpu.CompilerParams(
            dimension_semantics=("parallel",),          # shard grid on v7x 2TC
            vmem_limit_bytes=32 * 1024 * 1024,          # fits v5e/v6e/v7x
        ),
    )(x, w_pad, b_pad)
    return out[:M]


# ------------------------------- JAX glue -----------------------------------

def _im2col(x, k, pad):
    """x: NHWC -> patches [B*H*W, C*k*k]; per-row feature order (c, kh, kw)."""
    B, H, W, C = x.shape
    xp = jnp.pad(x, ((0, 0), (pad, pad), (pad, pad), (0, 0)))
    taps = [xp[:, kh:kh + H, kw:kw + W, :] for kh in range(k) for kw in range(k)]
    p = jnp.stack(taps, axis=0)                 # [k*k, B, H, W, C]
    p = jnp.transpose(p, (1, 2, 3, 4, 0))       # [B, H, W, C, k*k]
    return p.reshape(B * H * W, C * k * k)


def maxpool2x2(x):
    """2x2 max-pool, stride 2, NHWC, even H/W (plain JAX reshape+max)."""
    B, H, W, C = x.shape
    return jnp.max(x.reshape(B, H // 2, 2, W // 2, 2, C), axis=(2, 4))


def conv2d_same_relu(x, w_pad, b_pad, out_channels, k=5):
    """'same' conv (stride 1, pad k//2) + ReLU via im2col + Pallas matmul."""
    B, H, W, _ = x.shape
    patches = _im2col(x, k, k // 2)                       # [B*H*W, C*k*k]
    y = matmul_bias(patches, w_pad, b_pad, apply_relu=True)
    return y[:, :out_channels].reshape(B, H, W, out_channels)


def cnn_forward(x_nchw, prep, *, num_classes):
    x = jnp.transpose(x_nchw, (0, 2, 3, 1))               # NCHW -> NHWC
    x = conv2d_same_relu(x, prep["w0"], prep["b0"], 5)    # [B,28,28,5]
    x = maxpool2x2(x)                                     # [B,14,14,5]
    x = conv2d_same_relu(x, prep["w1"], prep["b1"], 5)    # [B,14,14,5]
    x = maxpool2x2(x)                                     # [B,7,7,5]
    B = x.shape[0]
    # flatten in torch NCHW order: (c, h, w)
    flat = jnp.transpose(x, (0, 3, 1, 2)).reshape(B, -1)  # [B, 5*7*7]
    logits = matmul_bias(flat, prep["wout"], prep["bout"], apply_relu=False)
    return logits[:, :num_classes]


# --------------------------- parameter handling ------------------------------

def init_params(key, num_classes=10):
    """Deterministic init with PyTorch-style shapes."""
    ks = jax.random.split(key, 6)

    def u(k, shape, fan_in):
        bound = 1.0 / jnp.sqrt(fan_in)
        return jax.random.uniform(k, shape, jnp.float32, -bound, bound)

    return {
        "w0": u(ks[0], (5, 1, 5, 5), 1 * 5 * 5),
        "b0": u(ks[1], (5,), 1 * 5 * 5),
        "w1": u(ks[2], (5, 5, 5, 5), 5 * 5 * 5),
        "b1": u(ks[3], (5,), 5 * 5 * 5),
        "wout": u(ks[4], (num_classes, 5 * 7 * 7), 5 * 7 * 7),
        "bout": u(ks[5], (num_classes,), 5 * 7 * 7),
    }


def prepare_params(params):
    """One-time prep: matmul layout, zero-pad K/N to 128 multiples, bf16 weights."""

    def conv_prep(w, b):
        OC, IC, k, _ = w.shape
        K = IC * k * k
        wmat = jnp.transpose(w.reshape(OC, K))            # [K, OC], (ic,kh,kw) rows
        Kp, Np = _round_up(K, 128), _round_up(OC, 128)
        w_pad = jnp.zeros((Kp, Np), jnp.bfloat16).at[:K, :OC].set(
            wmat.astype(jnp.bfloat16))
        b_pad = jnp.zeros((1, Np), jnp.float32).at[0, :OC].set(b)
        return w_pad, b_pad

    def fc_prep(w, b):
        N, K = w.shape                                    # torch [out, in]
        Kp, Np = _round_up(K, 128), _round_up(N, 128)
        w_pad = jnp.zeros((Kp, Np), jnp.bfloat16).at[:K, :N].set(
            jnp.transpose(w).astype(jnp.bfloat16))
        b_pad = jnp.zeros((1, Np), jnp.float32).at[0, :N].set(b)
        return w_pad, b_pad

    w0, b0 = conv_prep(params["w0"], params["b0"])
    w1, b1 = conv_prep(params["w1"], params["b1"])
    wout, bout = fc_prep(params["wout"], params["bout"])
    return {"w0": w0, "b0": b0, "w1": w1, "b1": b1, "wout": wout, "bout": bout}


if __name__ == "__main__":
    num_classes = 10
    key = jax.random.PRNGKey(0)
    k_x, k_p = jax.random.split(key)

    # MNIST-like input: 28x28 is required so the linear layer sees 5*7*7.
    images = jax.random.normal(k_x, (2, 1, 28, 28), dtype=jnp.float32)
    params = init_params(k_p, num_classes)
    prep = prepare_params(params)

    forward = jax.jit(functools.partial(cnn_forward, num_classes=num_classes))
    out = forward(images, prep)
    out = jax.block_until_ready(out)
    assert out.shape == (2, num_classes), out.shape
    assert out.dtype == jnp.float32
    print("KERNEL_OK")
</pallas_src>

<mosaic_0001>
module attributes {stable_mosaic.version = 11 : i64} {
  func.func @_matmul_bias_kernel(%arg0: i32, %arg1: memref<512x128xbf16, #tpu.memory_space<vmem>>, %arg2: memref<128x128xbf16, #tpu.memory_space<vmem>>, %arg3: memref<1x128xf32, #tpu.memory_space<vmem>>, %arg4: memref<512x128xf32, #tpu.memory_space<vmem>>) attributes {dimension_semantics = [#tpu.dimension_semantics<parallel>], iteration_bounds = array<i64: 4>, scalar_prefetch = 0 : i64, scratch_operands = 0 : i64, tpu.core_type = #tpu.core_type<tc>, window_params = [{transform_indices = @transform_0, window_bounds = array<i64: 512, 128>}, {pipeline_mode = #tpu.pipeline_mode<synchronous>, transform_indices = @transform_1, window_bounds = array<i64: 128, 128>}, {pipeline_mode = #tpu.pipeline_mode<synchronous>, transform_indices = @transform_2, window_bounds = array<i64: 1, 128>}, {transform_indices = @transform_3, window_bounds = array<i64: 512, 128>}]} {
    %c0 = arith.constant 0 : index
    %c0_0 = arith.constant 0 : index
    %0 = vector.load %arg1[%c0, %c0_0] : memref<512x128xbf16, #tpu.memory_space<vmem>>, vector<512x128xbf16>
    %c0_1 = arith.constant 0 : index
    %c0_2 = arith.constant 0 : index
    %1 = vector.load %arg2[%c0_1, %c0_2] : memref<128x128xbf16, #tpu.memory_space<vmem>>, vector<128x128xbf16>
    %cst = arith.constant dense<0.000000e+00> : vector<512x128xf32>
    %2 = tpu.matmul %0, %1, %cst {dimension_numbers = #tpu.dot_dimension_numbers<[1], [0], [0], [1], [0, 0, 1, 1], [], []>} : vector<512x128xbf16>, vector<128x128xbf16>, vector<512x128xf32> -> vector<512x128xf32>
    %c0_3 = arith.constant 0 : index
    %c0_4 = arith.constant 0 : index
    %3 = vector.load %arg3[%c0_3, %c0_4] : memref<1x128xf32, #tpu.memory_space<vmem>>, vector<1x128xf32>
    %4 = vector.broadcast %3 : vector<1x128xf32> to vector<512x128xf32>
    %5 = arith.addf %2, %4 : vector<512x128xf32>
    %cst_5 = arith.constant 0.000000e+00 : f32
    %6 = vector.broadcast %cst_5 : f32 to vector<512x128xf32>
    %7 = arith.maximumf %5, %6 : vector<512x128xf32>
    %c0_6 = arith.constant 0 : index
    %c0_7 = arith.constant 0 : index
    %8 = vector.load %arg4[%c0_6, %c0_7] : memref<512x128xf32, #tpu.memory_space<vmem>>, vector<512x128xf32>
    tpu.vector_store %arg4[%c0_6, %c0_7], %7 {strides = array<i32>} : memref<512x128xf32, #tpu.memory_space<vmem>>, vector<512x128xf32>,
    return
  }
  func.func @transform_0(%arg0: i32) -> (i32, i32) {
    %c0_i32 = arith.constant 0 : i32
    %c0_i32_0 = arith.constant 0 : i32
    return %arg0, %c0_i32 : i32, i32
  }
  func.func @transform_1(%arg0: i32) -> (i32, i32) {
    %c0_i32 = arith.constant 0 : i32
    %c0_i32_0 = arith.constant 0 : i32
    %c0_i32_1 = arith.constant 0 : i32
    return %c0_i32, %c0_i32_0 : i32, i32
  }
  func.func @transform_2(%arg0: i32) -> (i32, i32) {
    %c0_i32 = arith.constant 0 : i32
    %c0_i32_0 = arith.constant 0 : i32
    %c0_i32_1 = arith.constant 0 : i32
    return %c0_i32, %c0_i32_0 : i32, i32
  }
  func.func @transform_3(%arg0: i32) -> (i32, i32) {
    %c0_i32 = arith.constant 0 : i32
    %c0_i32_0 = arith.constant 0 : i32
    return %arg0, %c0_i32 : i32, i32
  }
}

module attributes {stable_mosaic.version = 11 : i64} {
  func.func @_matmul_bias_kernel(%arg0: i32, %arg1: memref<392x128xbf16, #tpu.memory_space<vmem>>, %arg2: memref<128x128xbf16, #tpu.memory_space<vmem>>, %arg3: memref<1x128xf32, #tpu.memory_space<vmem>>, %arg4: memref<392x128xf32, #tpu.memory_space<vmem>>) attributes {dimension_semantics = [#tpu.dimension_semantics<parallel>], iteration_bounds = array<i64: 1>, scalar_prefetch = 0 : i64, scratch_operands = 0 : i64, tpu.core_type = #tpu.core_type<tc>, window_params = [{transform_indices = @transform_0, window_bounds = array<i64: 392, 128>}, {pipeline_mode = #tpu.pipeline_mode<synchronous>, transform_indices = @transform_1, window_bounds = array<i64: 128, 128>}, {pipeline_mode = #tpu.pipeline_mode<synchronous>, transform_indices = @transform_2, window_bounds = array<i64: 1, 128>}, {transform_indices = @transform_3, window_bounds = array<i64: 392, 128>}]} {
    %c0 = arith.constant 0 : index
    %c0_0 = arith.constant 0 : index
    %0 = vector.load %arg1[%c0, %c0_0] : memref<392x128xbf16, #tpu.memory_space<vmem>>, vector<392x128xbf16>
    %c0_1 = arith.constant 0 : index
    %c0_2 = arith.constant 0 : index
    %1 = vector.load %arg2[%c0_1, %c0_2] : memref<128x128xbf16, #tpu.memory_space<vmem>>, vector<128x128xbf16>
    %cst = arith.constant dense<0.000000e+00> : vector<392x128xf32>
    %2 = tpu.matmul %0, %1, %cst {dimension_numbers = #tpu.dot_dimension_numbers<[1], [0], [0], [1], [0, 0, 1, 1], [], []>} : vector<392x128xbf16>, vector<128x128xbf16>, vector<392x128xf32> -> vector<392x128xf32>
    %c0_3 = arith.constant 0 : index
    %c0_4 = arith.constant 0 : index
    %3 = vector.load %arg3[%c0_3, %c0_4] : memref<1x128xf32, #tpu.memory_space<vmem>>, vector<1x128xf32>
    %4 = vector.broadcast %3 : vector<1x128xf32> to vector<392x128xf32>
    %5 = arith.addf %2, %4 : vector<392x128xf32>
    %cst_5 = arith.constant 0.000000e+00 : f32
    %6 = vector.broadcast %cst_5 : f32 to vector<392x128xf32>
    %7 = arith.maximumf %5, %6 : vector<392x128xf32>
    %c0_6 = arith.constant 0 : index
    %c0_7 = arith.constant 0 : index
    %8 = vector.load %arg4[%c0_6, %c0_7] : memref<392x128xf32, #tpu.memory_space<vmem>>, vector<392x128xf32>
    tpu.vector_store %arg4[%c0_6, %c0_7], %7 {strides = array<i32>} : memref<392x128xf32, #tpu.memory_space<vmem>>, vector<392x128xf32>,
    return
  }
  func.func @transform_0(%arg0: i32) -> (i32, i32) {
    %c0_i32 = arith.constant 0 : i32
    %c0_i32_0 = arith.constant 0 : i32
    return %arg0, %c0_i32 : i32, i32
  }
  func.func @transform_1(%arg0: i32) -> (i32, i32) {
    %c0_i32 = arith.constant 0 : i32
    %c0_i32_0 = arith.constant 0 : i32
    %c0_i32_1 = arith.constant 0 : i32
    return %c0_i32, %c0_i32_0 : i32, i32
  }
  func.func @transform_2(%arg0: i32) -> (i32, i32) {
    %c0_i32 = arith.constant 0 : i32
    %c0_i32_0 = arith.constant 0 : i32
    %c0_i32_1 = arith.constant 0 : i32
    return %c0_i32, %c0_i32_0 : i32, i32
  }
  func.func @transform_3(%arg0: i32) -> (i32, i32) {
    %c0_i32 = arith.constant 0 : i32
    %c0_i32_0 = arith.constant 0 : i32
    return %arg0, %c0_i32 : i32, i32
  }
}

module attributes {stable_mosaic.version = 11 : i64} {
  func.func @_matmul_bias_kernel(%arg0: i32, %arg1: memref<8x256xbf16, #tpu.memory_space<vmem>>, %arg2: memref<256x128xbf16, #tpu.memory_space<vmem>>, %arg3: memref<1x128xf32, #tpu.memory_space<vmem>>, %arg4: memref<8x128xf32, #tpu.memory_space<vmem>>) attributes {dimension_semantics = [#tpu.dimension_semantics<parallel>], iteration_bounds = array<i64: 1>, scalar_prefetch = 0 : i64, scratch_operands = 0 : i64, tpu.core_type = #tpu.core_type<tc>, window_params = [{transform_indices = @transform_0, window_bounds = array<i64: 8, 256>}, {pipeline_mode = #tpu.pipeline_mode<synchronous>, transform_indices = @transform_1, window_bounds = array<i64: 256, 128>}, {pipeline_mode = #tpu.pipeline_mode<synchronous>, transform_indices = @transform_2, window_bounds = array<i64: 1, 128>}, {transform_indices = @transform_3, window_bounds = array<i64: 8, 128>}]} {
    %c0 = arith.constant 0 : index
    %c0_0 = arith.constant 0 : index
    %0 = vector.load %arg1[%c0, %c0_0] : memref<8x256xbf16, #tpu.memory_space<vmem>>, vector<8x256xbf16>
    %c0_1 = arith.constant 0 : index
    %c0_2 = arith.constant 0 : index
    %1 = vector.load %arg2[%c0_1, %c0_2] : memref<256x128xbf16, #tpu.memory_space<vmem>>, vector<256x128xbf16>
    %cst = arith.constant dense<0.000000e+00> : vector<8x128xf32>
    %2 = tpu.matmul %0, %1, %cst {dimension_numbers = #tpu.dot_dimension_numbers<[1], [0], [0], [1], [0, 0, 1, 1], [], []>} : vector<8x256xbf16>, vector<256x128xbf16>, vector<8x128xf32> -> vector<8x128xf32>
    %c0_3 = arith.constant 0 : index
    %c0_4 = arith.constant 0 : index
    %3 = vector.load %arg3[%c0_3, %c0_4] : memref<1x128xf32, #tpu.memory_space<vmem>>, vector<1x128xf32>
    %4 = vector.broadcast %3 : vector<1x128xf32> to vector<8x128xf32>
    %5 = arith.addf %2, %4 : vector<8x128xf32>
    %c0_5 = arith.constant 0 : index
    %c0_6 = arith.constant 0 : index
    %6 = vector.load %arg4[%c0_5, %c0_6] : memref<8x128xf32, #tpu.memory_space<vmem>>, vector<8x128xf32>
    tpu.vector_store %arg4[%c0_5, %c0_6], %5 {strides = array<i32>} : memref<8x128xf32, #tpu.memory_space<vmem>>, vector<8x128xf32>,
    return
  }
  func.func @transform_0(%arg0: i32) -> (i32, i32) {
    %c0_i32 = arith.constant 0 : i32
    %c0_i32_0 = arith.constant 0 : i32
    return %arg0, %c0_i32 : i32, i32
  }
  func.func @transform_1(%arg0: i32) -> (i32, i32) {
    %c0_i32 = arith.constant 0 : i32
    %c0_i32_0 = arith.constant 0 : i32
    %c0_i32_1 = arith.constant 0 : i32
    return %c0_i32, %c0_i32_0 : i32, i32
  }
  func.func @transform_2(%arg0: i32) -> (i32, i32) {
    %c0_i32 = arith.constant 0 : i32
    %c0_i32_0 = arith.constant 0 : i32
    %c0_i32_1 = arith.constant 0 : i32
    return %c0_i32, %c0_i32_0 : i32, i32
  }
  func.func @transform_3(%arg0: i32) -> (i32, i32) {
    %c0_i32 = arith.constant 0 : i32
    %c0_i32_0 = arith.constant 0 : i32
    return %arg0, %c0_i32 : i32, i32
  }
}

</mosaic_0001>

<llo_original>
// kernel: cnn_forward.3
$region0: #{cnn_forward.3}
  #allocation0 [shape = 'u32[]', space=smem, size = 0x4, offset = 0x4, fixed_abs, tag = 'smem constant byte address 0x4 - core index']
  #allocation1 [shape = 'u32[72,128]{1,0:T(1,128)}', space=vmem, size = 0x9000, scoped, tag = 'internal scratch']
  %s0 = inlined_call_operand.vmem [shape: bf16[2048,128], index: 0, kind: input, shape index: {}]
  %s1 = inlined_call_operand.vmem [shape: bf16[128,128], index: 1, kind: input, shape index: {}]
  %s2 = inlined_call_operand.vmem [shape: f32[1,128], index: 2, kind: input, shape index: {}]
  %s3 = inlined_call_operand.vmem [shape: f32[2048,128], index: 3, kind: output, shape index: {}]
  %s4 = sld [smem:[#allocation0]]
  $region45: #{cnn_forward.3} parent=0
    _
  %s6 = ssub.s32 1, %s4
  %s7 = scalar_select 0, %s6, %s4
  loop: start=0, step=1, limit=6
  $region2: #{cnn_forward.3} parent=0 // loop_pre_header
    _
  $region3: #{cnn_forward.3} parent=0 // loop_header
    %s9 = sphi 0, %s13
    %p10 = scmp.ge.s32.totalorder %s9, 6
    %s19 = sphi 0, %s21
    %s22 = sphi 0, %s19
    %s23 = sphi 0, %s22
    %s39 = sphi 0, %s23
    %s43 = sphi 0, %s43
    %s45 = sphi 0, %s43
    %s46 = sphi 0, %s45
    %s60 = sphi 0, %s46
    %s64 = sphi 0, %s64
    %s66 = sphi 0, %s64
    %s67 = sphi 0, %s66
    %s81 = sphi 0, %s67
    %s87 = sphi 0, %s89
    %s90 = sphi 0, %s87
    %s91 = sphi 0, %s90
    %s107 = sphi 0, %s91
  $region4: #{cnn_forward.3} parent=0 // loop_header_branch
    %12 = sbr.rel (%p10) target = $region8
  $region5: #{cnn_forward.3} parent=0 // loop_body
    %s14 = ssub.s32 %s9, 1
    %s15 = ssub.s32 %s9, 2
    %s16 = sadd.s32 %s9, 1
    %s17 = ssub.s32 %s9, %s16
    %p18 = scmp.eq.s32.totalorder %s17, 0
    %s20 = sadd.s32 %s19, 1
    %s21 = scalar_select %p18, %s19, %s20
    %p24 = pneg %p18
    %p25 = scmp.eq.s32.totalorder %s9, 3
    %p26 = por %p24, %p25
    %p27 = scmp.ne.s32.totalorder %s19, %s22
    %p28 = scmp.eq.s32.totalorder %s9, 0
    %p29 = por %p27, %p28
    %p30 = scmp.ne.s32.totalorder %s19, %s22
    %p31 = scmp.eq.s32.totalorder %s14, 3
    %p32 = por %p30, %p31
    %p33 = scmp.ne.s32.totalorder %s22, %s23
    %p34 = scmp.eq.s32.totalorder %s14, 0
    %p35 = por %p33, %p34
    %p36 = scmp.ne.s32.totalorder %s22, %s23
    %p37 = scmp.eq.s32.totalorder %s15, 3
    %p38 = por %p36, %p37
    %p40 = scmp.ne.s32.totalorder %s23, %s39
    %p41 = scmp.eq.s32.totalorder %s15, 0
    %p42 = por %p40, %p41
    %s44 = sadd.s32 %s43, 1
    %p47 = scmp.eq.s32.totalorder %s9, 3
    %p48 = scmp.ne.s32.totalorder %s43, %s45
    %p49 = scmp.eq.s32.totalorder %s9, 0
    %p50 = por %p48, %p49
    %p51 = scmp.ne.s32.totalorder %s43, %s45
    %p52 = scmp.eq.s32.totalorder %s14, 3
    %p53 = por %p51, %p52
    %p54 = scmp.ne.s32.totalorder %s45, %s46
    %p55 = scmp.eq.s32.totalorder %s14, 0
    %p56 = por %p54, %p55
    %p57 = scmp.ne.s32.totalorder %s45, %s46
    %p58 = scmp.eq.s32.totalorder %s15, 3
    %p59 = por %p57, %p58
    %p61 = scmp.ne.s32.totalorder %s46, %s60
    %p62 = scmp.eq.s32.totalorder %s15, 0
    %p63 = por %p61, %p62
    %s65 = sadd.s32 %s64, 1
    %p68 = scmp.eq.s32.totalorder %s9, 3
    %p69 = scmp.ne.s32.totalorder %s64, %s66
    %p70 = scmp.eq.s32.totalorder %s9, 0
    %p71 = por %p69, %p70
    %p72 = scmp.ne.s32.totalorder %s64, %s66
    %p73 = scmp.eq.s32.totalorder %s14, 3
    %p74 = por %p72, %p73
    %p75 = scmp.ne.s32.totalorder %s66, %s67
    %p76 = scmp.eq.s32.totalorder %s14, 0
    %p77 = por %p75, %p76
    %p78 = scmp.ne.s32.totalorder %s66, %s67
    %p79 = scmp.eq.s32.totalorder %s15, 3
    %p80 = por %p78, %p79
    %p82 = scmp.ne.s32.totalorder %s67, %s81
    %p83 = scmp.eq.s32.totalorder %s15, 0
    %p84 = por %p82, %p83
    %s85 = ssub.s32 %s9, %s16
    %p86 = scmp.eq.s32.totalorder %s85, 0
    %s88 = sadd.s32 %s87, 1
    %s89 = scalar_select %p86, %s87, %s88
    %p92 = pneg %p86
    %p93 = scmp.eq.s32.totalorder %s9, 3
    %p94 = por %p92, %p93
    %p95 = scmp.ne.s32.totalorder %s87, %s90
    %p96 = scmp.eq.s32.totalorder %s9, 0
    %p97 = por %p95, %p96
    %p98 = scmp.ne.s32.totalorder %s87, %s90
    %p99 = scmp.eq.s32.totalorder %s14, 3
    %p100 = por %p98, %p99
    %p101 = scmp.ne.s32.totalorder %s90, %s91
    %p102 = scmp.eq.s32.totalorder %s14, 0
    %p103 = por %p101, %p102
    %p104 = scmp.ne.s32.totalorder %s90, %s91
    %p105 = scmp.eq.s32.totalorder %s15, 3
    %p106 = por %p104, %p105
    %p108 = scmp.ne.s32.totalorder %s91, %s107
    %p109 = scmp.eq.s32.totalorder %s15, 0
    %p110 = por %p108, %p109
    %p111 = scmp.le.s32.totalorder 1, %s9
    %p112 = scmp.lt.s32.totalorder %s9, 5
    %p113 = pnand %p111, %p112
    %p114 = pneg %p113
    // Predicated region
    $region9: #{cnn_forward.3} parent=5 // pred_check
      _
    $region10: #{cnn_forward.3} parent=5 // pred_check_branch
      %116 = sbr.rel (%p113) target = $region12
    $region11: #{cnn_forward.3} parent=5 // pred_region
      %s117 = ssub.s32 %s9, 1
      // Predicated region
      $region13: #{cnn_forward.3} parent=11 // pred_check
        %p118 = pneg %p56
      $region14: #{cnn_forward.3} parent=11 // pred_check_branch
        %120 = sbr.rel (%p118) target = $region16
      $region15: #{cnn_forward.3} parent=11 // pred_region
        _
      $region16: #{cnn_forward.3} parent=11 // pred_fallthru
        _
      // Predicated region
      $region17: #{cnn_forward.3} parent=11 // pred_check
        %p121 = pneg %p77
      $region18: #{cnn_forward.3} parent=11 // pred_check_branch
        %123 = sbr.rel (%p121) target = $region20
      $region19: #{cnn_forward.3} parent=11 // pred_region
        _
      $region20: #{cnn_forward.3} parent=11 // pred_fallthru
        _
    $region12: #{cnn_forward.3} parent=5 // pred_fallthru
      _
    %p124 = scmp.lt.s32.totalorder %s9, 4
    // Predicated region
    $region21: #{cnn_forward.3} parent=5 // pred_check
      %p125 = pneg %p124
    $region22: #{cnn_forward.3} parent=5 // pred_check_branch
      %127 = sbr.rel (%p125) target = $region24
    $region23: #{cnn_forward.3} parent=5 // pred_region
      // Predicated region
      $region25: #{cnn_forward.3} parent=23 // pred_check
        %p128 = pneg %p29
      $region26: #{cnn_forward.3} parent=23 // pred_check_branch
        %130 = sbr.rel (%p128) target = $region28
      $region27: #{cnn_forward.3} parent=23 // pred_region
        %s131 = smul.u32 64, %s9
        %p132 = scmp.lt.s32.totalorder %s131, 255
        %s133 = scalar_select %p132, %s131, 255
        %s134 = smul.addr %s133, 4
        %s135 = scalar_lea.vmem %s0, %s134
        %s136 = smul.u32 64, %s9
      $region28: #{cnn_forward.3} parent=23 // pred_fallthru
        _
    $region24: #{cnn_forward.3} parent=5 // pred_fallthru
      _
    %p137 = scmp.le.s32.totalorder 1, %s9
    %p138 = scmp.lt.s32.totalorder %s9, 5
    %p139 = pnand %p137, %p138
    %p140 = pneg %p139
    // Predicated region
    $region29: #{cnn_forward.3} parent=5 // pred_check
      _
    $region30: #{cnn_forward.3} parent=5 // pred_check_branch
      %142 = sbr.rel (%p139) target = $region32
    $region31: #{cnn_forward.3} parent=5 // pred_region
      %s143 = ssub.s32 %s9, 1
      %s144 = smul.u32 64, %s14
      %p145 = scmp.lt.s32.totalorder %s144, 255
      %s146 = scalar_select %p145, %s144, 255
      %s147 = smul.addr %s146, 4
      %s148 = scalar_lea.vmem %s0, %s147
      %p149 = pneg %p35
      %p150 = pneg %p32
      %p151 = pneg %p56
      %p152 = pneg %p53
      %p153 = pneg %p77
      %p154 = pneg %p74
      %p155 = pneg %p103
      %p156 = pneg %p100
      %s157 = smul.u32 64, %s14
      %p158 = scmp.lt.s32.totalorder %s157, 255
      %s159 = scalar_select %p158, %s157, 255
      %s160 = smul.addr %s159, 8
      %s161 = scalar_lea.vmem %s3, %s160
      %s162 = smul.u32 64, %s14
      %p163 = scmp.lt.s32.totalorder %s162, 255
      %s164 = scalar_select %p163, %s162, 255
      %s165 = smul.addr %s164, 4
      %s166 = scalar_lea.vmem %s0, %s165
      %s167 = smul.u32 64, %s14
      %s168 = smul.u32 64, %s14
      %p169 = scmp.lt.s32.totalorder %s168, 255
      %s170 = scalar_select %p169, %s168, 255
      %s171 = smul.addr %s170, 8
      %s172 = scalar_lea.vmem %s3, %s171
      %s173 = smul.u32 64, %s14
      %v174 = vld [vmem:[%s166] sm:$0xf]
      %v175 = vld [vmem:[%s166 + $0x4] sm:$0xf]
      %v176 = vld [vmem:[%s166 + $0x8] sm:$0xf]
      %v177 = vld [vmem:[%s166 + $0xc] sm:$0xf]
      %v178 = vld [vmem:[%s166 + $0x10] sm:$0xf]
      %v179 = vld [vmem:[%s166 + $0x14] sm:$0xf]
      %v180 = vld [vmem:[%s166 + $0x18] sm:$0xf]
      %v181 = vld [vmem:[%s166 + $0x1c] sm:$0xf]
      %v182 = vld [vmem:[%s166 + $0x20] sm:$0xf]
      %v183 = vld [vmem:[%s166 + $0x24] sm:$0xf]
      %v184 = vld [vmem:[%s166 + $0x28] sm:$0xf]
      %v185 = vld [vmem:[%s166 + $0x2c] sm:$0xf]
      %v186 = vld [vmem:[%s166 + $0x30] sm:$0xf]
      %v187 = vld [vmem:[%s166 + $0x34] sm:$0xf]
      %v188 = vld [vmem:[%s166 + $0x38] sm:$0xf]
      %v189 = vld [vmem:[%s166 + $0x3c] sm:$0xf]
      %v190 = vld [vmem:[%s166 + $0x40] sm:$0xf]
      %v191 = vld [vmem:[%s166 + $0x44] sm:$0xf]
      %v192 = vld [vmem:[%s166 + $0x48] sm:$0xf]
      %v193 = vld [vmem:[%s166 + $0x4c] sm:$0xf]
      %v194 = vld [vmem:[%s166 + $0x50] sm:$0xf]
      %v195 = vld [vmem:[%s166 + $0x54] sm:$0xf]
      %v196 = vld [vmem:[%s166 + $0x58] sm:$0xf]
      %v197 = vld [vmem:[%s166 + $0x5c] sm:$0xf]
      %v198 = vld [vmem:[%s166 + $0x60] sm:$0xf]
      %v199 = vld [vmem:[%s166 + $0x64] sm:$0xf]
      %v200 = vld [vmem:[%s166 + $0x68] sm:$0xf]
      %v201 = vld [vmem:[%s166 + $0x6c] sm:$0xf]
      %v202 = vld [vmem:[%s166 + $0x70] sm:$0xf]
      %v203 = vld [vmem:[%s166 + $0x74] sm:$0xf]
      %v204 = vld [vmem:[%s166 + $0x78] sm:$0xf]
      %v205 = vld [vmem:[%s166 + $0x7c] sm:$0xf]
      %v206 = vld [vmem:[%s166 + $0x80] sm:$0xf]
      %v207 = vld [vmem:[%s166 + $0x84] sm:$0xf]
      %v208 = vld [vmem:[%s166 + $0x88] sm:$0xf]
      %v209 = vld [vmem:[%s166 + $0x8c] sm:$0xf]
      %v210 = vld [vmem:[%s166 + $0x90] sm:$0xf]
      %v211 = vld [vmem:[%s166 + $0x94] sm:$0xf]
      %v212 = vld [vmem:[%s166 + $0x98] sm:$0xf]
      %v213 = vld [vmem:[%s166 + $0x9c] sm:$0xf]
      %v214 = vld [vmem:[%s166 + $0xa0] sm:$0xf]
      %v215 = vld [vmem:[%s166 + $0xa4] sm:$0xf]
      %v216 = vld [vmem:[%s166 + $0xa8] sm:$0xf]
      %v217 = vld [vmem:[%s166 + $0xac] sm:$0xf]
      %v218 = vld [vmem:[%s166 + $0xb0] sm:$0xf]
      %v219 = vld [vmem:[%s166 + $0xb4] sm:$0xf]
      %v220 = vld [vmem:[%s166 + $0xb8] sm:$0xf]
      %v221 = vld [vmem:[%s166 + $0xbc] sm:$0xf]
      %v222 = vld [vmem:[%s166 + $0xc0] sm:$0xf]
      %v223 = vld [vmem:[%s166 + $0xc4] sm:$0xf]
      %v224 = vld [vmem:[%s166 + $0xc8] sm:$0xf]
      %v225 = vld [vmem:[%s166 + $0xcc] sm:$0xf]
      %v226 = vld [vmem:[%s166 + $0xd0] sm:$0xf]
      %v227 = vld [vmem:[%s166 + $0xd4] sm:$0xf]
      %v228 = vld [vmem:[%s166 + $0xd8] sm:$0xf]
      %v229 = vld [vmem:[%s166 + $0xdc] sm:$0xf]
      %v230 = vld [vmem:[%s166 + $0xe0] sm:$0xf]
      %v231 = vld [vmem:[%s166 + $0xe4] sm:$0xf]
      %v232 = vld [vmem:[%s166 + $0xe8] sm:$0xf]
      %v233 = vld [vmem:[%s166 + $0xec] sm:$0xf]
      %v234 = vld [vmem:[%s166 + $0xf0] sm:$0xf]
      %v235 = vld [vmem:[%s166 + $0xf4] sm:$0xf]
      %v236 = vld [vmem:[%s166 + $0xf8] sm:$0xf]
      %v237 = vld [vmem:[%s166 + $0xfc] sm:$0xf]
      %v238 = vld [vmem:[%s1] sm:$0xf]
      %v239 = vld [vmem:[%s1 + $0x4] sm:$0xf]
      %v240 = vld [vmem:[%s1 + $0x8] sm:$0xf]
      %v241 = vld [vmem:[%s1 + $0xc] sm:$0xf]
      %v242 = vld [vmem:[%s1 + $0x10] sm:$0xf]
      %v243 = vld [vmem:[%s1 + $0x14] sm:$0xf]
      %v244 = vld [vmem:[%s1 + $0x18] sm:$0xf]
      %v245 = vld [vmem:[%s1 + $0x1c] sm:$0xf]
      %v246 = vld [vmem:[%s1 + $0x20] sm:$0xf]
      %v247 = vld [vmem:[%s1 + $0x24] sm:$0xf]
      %v248 = vld [vmem:[%s1 + $0x28] sm:$0xf]
      %v249 = vld [vmem:[%s1 + $0x2c] sm:$0xf]
      %v250 = vld [vmem:[%s1 + $0x30] sm:$0xf]
      %v251 = vld [vmem:[%s1 + $0x34] sm:$0xf]
      %v252 = vld [vmem:[%s1 + $0x38] sm:$0xf]
      %v253 = vld [vmem:[%s1 + $0x3c] sm:$0xf]
      %v254 = vld [vmem:[%s2] sm:$0x1]
      %v256 = vperm.slane %v254, 0
      %v322 = vunpack.c.l.b16 %v174
      %v323 = vunpack.c.l.b16 %v175
      %v324 = vunpack.c.l.b16 %v176
      %v325 = vunpack.c.l.b16 %v177
      %v326 = vunpack.c.l.b16 %v178
      %v327 = vunpack.c.l.b16 %v179
      %v328 = vunpack.c.l.b16 %v180
      %v329 = vunpack.c.l.b16 %v181
      %v330 = vunpack.c.l.b16 %v182
      %v331 = vunpack.c.l.b16 %v183
      %v332 = vunpack.c.l.b16 %v184
      %v333 = vunpack.c.l.b16 %v185
      %v334 = vunpack.c.l.b16 %v186
      %v335 = vunpack.c.l.b16 %v187
      %v336 = vunpack.c.l.b16 %v188
      %v337 = vunpack.c.l.b16 %v189
      %v338 = vunpack.c.l.b16 %v190
      %v339 = vunpack.c.l.b16 %v191
      %v340 = vunpack.c.l.b16 %v192
      %v341 = vunpack.c.l.b16 %v193
      %v342 = vunpack.c.l.b16 %v194
      %v343 = vunpack.c.l.b16 %v195
      %v344 = vunpack.c.l.b16 %v196
      %v345 = vunpack.c.l.b16 %v197
      %v346 = vunpack.c.l.b16 %v198
      %v347 = vunpack.c.l.b16 %v199
      %v348 = vunpack.c.l.b16 %v200
      %v349 = vunpack.c.l.b16 %v201
      %v350 = vunpack.c.l.b16 %v202
      %v351 = vunpack.c.l.b16 %v203
      %v352 = vunpack.c.l.b16 %v204
      %v353 = vunpack.c.l.b16 %v205
      %v354 = vunpack.c.l.b16 %v206
      %v355 = vunpack.c.l.b16 %v207
      %v356 = vunpack.c.l.b16 %v208
      %v357 = vunpack.c.l.b16 %v209
      %v358 = vunpack.c.l.b16 %v210
      %v359 = vunpack.c.l.b16 %v211
      %v360 = vunpack.c.l.b16 %v212
      %v361 = vunpack.c.l.b16 %v213
      %v362 = vunpack.c.l.b16 %v214
      %v363 = vunpack.c.l.b16 %v215
      %v364 = vunpack.c.l.b16 %v216
      %v365 = vunpack.c.l.b16 %v217
      %v366 = vunpack.c.l.b16 %v218
      %v367 = vunpack.c.l.b16 %v219
      %v368 = vunpack.c.l.b16 %v220
      %v369 = vunpack.c.l.b16 %v221
      %v370 = vunpack.c.l.b16 %v222
      %v371 = vunpack.c.l.b16 %v223
      %v372 = vunpack.c.l.b16 %v224
      %v373 = vunpack.c.l.b16 %v225
      %v374 = vunpack.c.l.b16 %v226
      %v375 = vunpack.c.l.b16 %v227
      %v376 = vunpack.c.l.b16 %v228
      %v377 = vunpack.c.l.b16 %v229
      %v378 = vunpack.c.l.b16 %v230
      %v379 = vunpack.c.l.b16 %v231
      %v380 = vunpack.c.l.b16 %v232
      %v381 = vunpack.c.l.b16 %v233
      %v382 = vunpack.c.l.b16 %v234
      %v383 = vunpack.c.l.b16 %v235
      %v384 = vunpack.c.l.b16 %v236
      %v385 = vunpack.c.l.b16 %v237
      %v386 = vpack.c.b16 %v323, %v322
      %v387 = vpack.c.b16 %v325, %v324
      %v388 = vpack.c.b16 %v327, %v326
      %v389 = vpack.c.b16 %v329, %v328
      %v390 = vpack.c.b16 %v331, %v330
      %v391 = vpack.c.b16 %v333, %v332
      %v392 = vpack.c.b16 %v335, %v334
      %v393 = vpack.c.b16 %v337, %v336
      %v394 = vpack.c.b16 %v339, %v338
      %v395 = vpack.c.b16 %v341, %v340
      %v396 = vpack.c.b16 %v343, %v342
      %v397 = vpack.c.b16 %v345, %v344
      %v398 = vpack.c.b16 %v347, %v346
      %v399 = vpack.c.b16 %v349, %v348
      %v400 = vpack.c.b16 %v351, %v350
      %v401 = vpack.c.b16 %v353, %v352
      %v402 = vpack.c.b16 %v355, %v354
      %v403 = vpack.c.b16 %v357, %v356
      %v404 = vpack.c.b16 %v359, %v358
      %v405 = vpack.c.b16 %v361, %v360
      %v406 = vpack.c.b16 %v363, %v362
      %v407 = vpack.c.b16 %v365, %v364
      %v408 = vpack.c.b16 %v367, %v366
      %v409 = vpack.c.b16 %v369, %v368
      %v410 = vpack.c.b16 %v371, %v370
      %v411 = vpack.c.b16 %v373, %v372
      %v412 = vpack.c.b16 %v375, %v374
      %v413 = vpack.c.b16 %v377, %v376
      %v414 = vpack.c.b16 %v379, %v378
      %v415 = vpack.c.b16 %v381, %v380
      %v416 = vpack.c.b16 %v383, %v382
      %v417 = vpack.c.b16 %v385, %v384
      %v466 = vunpack.c.l.b16 %v238
      %v467 = vunpack.c.l.b16 %v239
      %v468 = vunpack.c.l.b16 %v240
      %v469 = vunpack.c.l.b16 %v241
      %v470 = vunpack.c.l.b16 %v242
      %v471 = vunpack.c.l.b16 %v243
      %v472 = vunpack.c.l.b16 %v244
      %v473 = vunpack.c.l.b16 %v245
      %v474 = vunpack.c.l.b16 %v246
      %v475 = vunpack.c.l.b16 %v247
      %v476 = vunpack.c.l.b16 %v248
      %v477 = vunpack.c.l.b16 %v249
      %v478 = vunpack.c.l.b16 %v250
      %v479 = vunpack.c.l.b16 %v251
      %v480 = vunpack.c.l.b16 %v252
      %v481 = vunpack.c.l.b16 %v253
      %v482 = vpack.c.b16 %v467, %v466
      %v483 = vpack.c.b16 %v469, %v468
      %v484 = vpack.c.b16 %v471, %v470
      %v485 = vpack.c.b16 %v473, %v472
      %v486 = vpack.c.b16 %v475, %v474
      %v487 = vpack.c.b16 %v477, %v476
      %v488 = vpack.c.b16 %v479, %v478
      %v489 = vpack.c.b16 %v481, %v480
      %498 = vmatpush.bf16.msra.mxu0 %v489
      %499 = vmatpush.bf16.msra.mxu0 %v488
      %500 = vmatpush.bf16.msra.mxu0 %v487
      %501 = vmatpush.bf16.msra.mxu0 %v486
      %502 = vmatpush.bf16.msra.mxu0 %v485
      %503 = vmatpush.bf16.msra.mxu0 %v484
      %504 = vmatpush.bf16.msra.mxu0 %v483
      %505 = vmatpush.bf16.msra.mxu0 %v482
      %506 = vmatmul.bf16.gmra.mxu0 %v386
      %v507 = vpop.f32.mrf.mxu0
      %v508 = vadd.f32 %v256, %v507
      %v509 = vpop.f32.mrf.mxu0
      %v510 = vadd.f32 %v256, %v509
      %511 = vmatmul.bf16.gmra.mxu0 %v387
      %v512 = vpop.f32.mrf.mxu0
      %v513 = vadd.f32 %v256, %v512
      %v514 = vpop.f32.mrf.mxu0
      %v515 = vadd.f32 %v256, %v514
      %516 = vmatmul.bf16.gmra.mxu0 %v388
      %v517 = vpop.f32.mrf.mxu0
      %v518 = vadd.f32 %v256, %v517
      %v519 = vpop.f32.mrf.mxu0
      %v520 = vadd.f32 %v256, %v519
      %521 = vmatmul.bf16.gmra.mxu0 %v389
      %v522 = vpop.f32.mrf.mxu0
      %v523 = vadd.f32 %v256, %v522
      %v524 = vpop.f32.mrf.mxu0
      %v525 = vadd.f32 %v256, %v524
      %526 = vmatmul.bf16.gmra.mxu0 %v390
      %v527 = vpop.f32.mrf.mxu0
      %v528 = vadd.f32 %v256, %v527
      %v529 = vpop.f32.mrf.mxu0
      %v530 = vadd.f32 %v256, %v529
      %531 = vmatmul.bf16.gmra.mxu0 %v391
      %v532 = vpop.f32.mrf.mxu0
      %v533 = vadd.f32 %v256, %v532
      %v534 = vpop.f32.mrf.mxu0
      %v535 = vadd.f32 %v256, %v534
      %536 = vmatmul.bf16.gmra.mxu0 %v392
      %v537 = vpop.f32.mrf.mxu0
      %v538 = vadd.f32 %v256, %v537
      %v539 = vpop.f32.mrf.mxu0
      %v540 = vadd.f32 %v256, %v539
      %541 = vmatmul.bf16.gmra.mxu0 %v393
      %v542 = vpop.f32.mrf.mxu0
      %v543 = vadd.f32 %v256, %v542
      %v544 = vpop.f32.mrf.mxu0
      %v545 = vadd.f32 %v256, %v544
      %546 = vmatmul.bf16.gmra.mxu0 %v394
      %v547 = vpop.f32.mrf.mxu0
      %v548 = vadd.f32 %v256, %v547
      %v549 = vpop.f32.mrf.mxu0
      %v550 = vadd.f32 %v256, %v549
      %551 = vmatmul.bf16.gmra.mxu0 %v395
      %v552 = vpop.f32.mrf.mxu0
      %v553 = vadd.f32 %v256, %v552
      %v554 = vpop.f32.mrf.mxu0
      %v555 = vadd.f32 %v256, %v554
      %556 = vmatmul.bf16.gmra.mxu0 %v396
      %v557 = vpop.f32.mrf.mxu0
      %v558 = vadd.f32 %v256, %v557
      %v559 = vpop.f32.mrf.mxu0
      %v560 = vadd.f32 %v256, %v559
      %561 = vmatmul.bf16.gmra.mxu0 %v397
      %v562 = vpop.f32.mrf.mxu0
      %v563 = vadd.f32 %v256, %v562
      %v564 = vpop.f32.mrf.mxu0
      %v565 = vadd.f32 %v256, %v564
      %566 = vmatmul.bf16.gmra.mxu0 %v398
      %v567 = vpop.f32.mrf.mxu0
      %v568 = vadd.f32 %v256, %v567
      %v569 = vpop.f32.mrf.mxu0
      %v570 = vadd.f32 %v256, %v569
      %571 = vmatmul.bf16.gmra.mxu0 %v399
      %v572 = vpop.f32.mrf.mxu0
      %v573 = vadd.f32 %v256, %v572
      %v574 = vpop.f32.mrf.mxu0
      %v575 = vadd.f32 %v256, %v574
      %576 = vmatmul.bf16.gmra.mxu0 %v400
      %v577 = vpop.f32.mrf.mxu0
      %v578 = vadd.f32 %v256, %v577
      %v579 = vpop.f32.mrf.mxu0
      %v580 = vadd.f32 %v256, %v579
      %581 = vmatmul.bf16.gmra.mxu0 %v401
      %v582 = vpop.f32.mrf.mxu0
      %v583 = vadd.f32 %v256, %v582
      %v584 = vpop.f32.mrf.mxu0
      %v585 = vadd.f32 %v256, %v584
      %586 = vmatmul.bf16.gmra.mxu0 %v402
      %v587 = vpop.f32.mrf.mxu0
      %v588 = vadd.f32 %v256, %v587
      %v589 = vpop.f32.mrf.mxu0
      %v590 = vadd.f32 %v256, %v589
      %591 = vmatmul.bf16.gmra.mxu0 %v403
      %v592 = vpop.f32.mrf.mxu0
      %v593 = vadd.f32 %v256, %v592
      %v594 = vpop.f32.mrf.mxu0
      %v595 = vadd.f32 %v256, %v594
      %596 = vmatmul.bf16.gmra.mxu0 %v404
      %v597 = vpop.f32.mrf.mxu0
      %v598 = vadd.f32 %v256, %v597
      %v599 = vpop.f32.mrf.mxu0
      %v600 = vadd.f32 %v256, %v599
      %601 = vmatmul.bf16.gmra.mxu0 %v405
      %v602 = vpop.f32.mrf.mxu0
      %v603 = vadd.f32 %v256, %v602
      %v604 = vpop.f32.mrf.mxu0
      %v605 = vadd.f32 %v256, %v604
      %606 = vmatmul.bf16.gmra.mxu0 %v406
      %v607 = vpop.f32.mrf.mxu0
      %v608 = vadd.f32 %v256, %v607
      %v609 = vpop.f32.mrf.mxu0
      %v610 = vadd.f32 %v256, %v609
      %611 = vmatmul.bf16.gmra.mxu0 %v407
      %v612 = vpop.f32.mrf.mxu0
      %v613 = vadd.f32 %v256, %v612
      %v614 = vpop.f32.mrf.mxu0
      %v615 = vadd.f32 %v256, %v614
      %616 = vmatmul.bf16.gmra.mxu0 %v408
      %v617 = vpop.f32.mrf.mxu0
      %v618 = vadd.f32 %v256, %v617
      %v619 = vpop.f32.mrf.mxu0
      %v620 = vadd.f32 %v256, %v619
      %621 = vmatmul.bf16.gmra.mxu0 %v409
      %v622 = vpop.f32.mrf.mxu0
      %v623 = vadd.f32 %v256, %v622
      %v624 = vpop.f32.mrf.mxu0
      %v625 = vadd.f32 %v256, %v624
      %626 = vmatmul.bf16.gmra.mxu0 %v410
      %v627 = vpop.f32.mrf.mxu0
      %v628 = vadd.f32 %v256, %v627
      %v629 = vpop.f32.mrf.mxu0
      %v630 = vadd.f32 %v256, %v629
      %631 = vmatmul.bf16.gmra.mxu0 %v411
      %v632 = vpop.f32.mrf.mxu0
      %v633 = vadd.f32 %v256, %v632
      %v634 = vpop.f32.mrf.mxu0
      %v635 = vadd.f32 %v256, %v634
      %636 = vmatmul.bf16.gmra.mxu0 %v412
      %v637 = vpop.f32.mrf.mxu0
      %v638 = vadd.f32 %v256, %v637
      %v639 = vpop.f32.mrf.mxu0
      %v640 = vadd.f32 %v256, %v639
      %641 = vmatmul.bf16.gmra.mxu0 %v413
      %v642 = vpop.f32.mrf.mxu0
      %v643 = vadd.f32 %v256, %v642
      %v644 = vpop.f32.mrf.mxu0
      %v645 = vadd.f32 %v256, %v644
      %646 = vmatmul.bf16.gmra.mxu0 %v414
      %v647 = vpop.f32.mrf.mxu0
      %v648 = vadd.f32 %v256, %v647
      %v649 = vpop.f32.mrf.mxu0
      %v650 = vadd.f32 %v256, %v649
      %651 = vmatmul.bf16.gmra.mxu0 %v415
      %v652 = vpop.f32.mrf.mxu0
      %v653 = vadd.f32 %v256, %v652
      %v654 = vpop.f32.mrf.mxu0
      %v655 = vadd.f32 %v256, %v654
      %656 = vmatmul.bf16.gmra.mxu0 %v416
      %v657 = vpop.f32.mrf.mxu0
      %v658 = vadd.f32 %v256, %v657
      %v659 = vpop.f32.mrf.mxu0
      %v660 = vadd.f32 %v256, %v659
      %661 = vmatmul.bf16.gmra.mxu0 %v417
      %v662 = vpop.f32.mrf.mxu0
      %v663 = vadd.f32 %v256, %v662
      %v664 = vpop.f32.mrf.mxu0
      %v665 = vadd.f32 %v256, %v664
      %666 = vdwg.mxu0
      %v667 = vmax.f32 %v508, 0.0
      %v668 = vmax.f32 %v510, 0.0
      %v669 = vmax.f32 %v513, 0.0
      %v670 = vmax.f32 %v515, 0.0
      %v671 = vmax.f32 %v518, 0.0
      %v672 = vmax.f32 %v520, 0.0
      %v673 = vmax.f32 %v523, 0.0
      %v674 = vmax.f32 %v525, 0.0
      %v675 = vmax.f32 %v528, 0.0
      %v676 = vmax.f32 %v530, 0.0
      %v677 = vmax.f32 %v533, 0.0
      %v678 = vmax.f32 %v535, 0.0
      %v679 = vmax.f32 %v538, 0.0
      %v680 = vmax.f32 %v540, 0.0
      %v681 = vmax.f32 %v543, 0.0
      %v682 = vmax.f32 %v545, 0.0
      %v683 = vmax.f32 %v548, 0.0
      %v684 = vmax.f32 %v550, 0.0
      %v685 = vmax.f32 %v553, 0.0
      %v686 = vmax.f32 %v555, 0.0
      %v687 = vmax.f32 %v558, 0.0
      %v688 = vmax.f32 %v560, 0.0
      %v689 = vmax.f32 %v563, 0.0
      %v690 = vmax.f32 %v565, 0.0
      %v691 = vmax.f32 %v568, 0.0
      %v692 = vmax.f32 %v570, 0.0
      %v693 = vmax.f32 %v573, 0.0
      %v694 = vmax.f32 %v575, 0.0
      %v695 = vmax.f32 %v578, 0.0
      %v696 = vmax.f32 %v580, 0.0
      %v697 = vmax.f32 %v583, 0.0
      %v698 = vmax.f32 %v585, 0.0
      %v699 = vmax.f32 %v588, 0.0
      %v700 = vmax.f32 %v590, 0.0
      %v701 = vmax.f32 %v593, 0.0
      %v702 = vmax.f32 %v595, 0.0
      %v703 = vmax.f32 %v598, 0.0
      %v704 = vmax.f32 %v600, 0.0
      %v705 = vmax.f32 %v603, 0.0
      %v706 = vmax.f32 %v605, 0.0
      %v707 = vmax.f32 %v608, 0.0
      %v708 = vmax.f32 %v610, 0.0
      %v709 = vmax.f32 %v613, 0.0
      %v710 = vmax.f32 %v615, 0.0
      %v711 = vmax.f32 %v618, 0.0
      %v712 = vmax.f32 %v620, 0.0
      %v713 = vmax.f32 %v623, 0.0
      %v714 = vmax.f32 %v625, 0.0
      %v715 = vmax.f32 %v628, 0.0
      %v716 = vmax.f32 %v630, 0.0
      %v717 = vmax.f32 %v633, 0.0
      %v718 = vmax.f32 %v635, 0.0
      %v719 = vmax.f32 %v638, 0.0
      %v720 = vmax.f32 %v640, 0.0
      %v721 = vmax.f32 %v643, 0.0
      %v722 = vmax.f32 %v645, 0.0
      %v723 = vmax.f32 %v648, 0.0
      %v724 = vmax.f32 %v650, 0.0
      %v725 = vmax.f32 %v653, 0.0
      %v726 = vmax.f32 %v655, 0.0
      %v727 = vmax.f32 %v658, 0.0
      %v728 = vmax.f32 %v660, 0.0
      %v729 = vmax.f32 %v663, 0.0
      %v730 = vmax.f32 %v665, 0.0
      %731 = vst [vmem:[%s172] sm:$0xff] %v667
      %732 = vst [vmem:[%s172 + $0x8] sm:$0xff] %v668
      %733 = vst [vmem:[%s172 + $0x10] sm:$0xff] %v669
      %734 = vst [vmem:[%s172 + $0x18] sm:$0xff] %v670
      %735 = vst [vmem:[%s172 + $0x20] sm:$0xff] %v671
      %736 = vst [vmem:[%s172 + $0x28] sm:$0xff] %v672
      %737 = vst [vmem:[%s172 + $0x30] sm:$0xff] %v673
      %738 = vst [vmem:[%s172 + $0x38] sm:$0xff] %v674
      %739 = vst [vmem:[%s172 + $0x40] sm:$0xff] %v675
      %740 = vst [vmem:[%s172 + $0x48] sm:$0xff] %v676
      %741 = vst [vmem:[%s172 + $0x50] sm:$0xff] %v677
      %742 = vst [vmem:[%s172 + $0x58] sm:$0xff] %v678
      %743 = vst [vmem:[%s172 + $0x60] sm:$0xff] %v679
      %744 = vst [vmem:[%s172 + $0x68] sm:$0xff] %v680
      %745 = vst [vmem:[%s172 + $0x70] sm:$0xff] %v681
      %746 = vst [vmem:[%s172 + $0x78] sm:$0xff] %v682
      %747 = vst [vmem:[%s172 + $0x80] sm:$0xff] %v683
      %748 = vst [vmem:[%s172 + $0x88] sm:$0xff] %v684
      %749 = vst [vmem:[%s172 + $0x90] sm:$0xff] %v685
      %750 = vst [vmem:[%s172 + $0x98] sm:$0xff] %v686
      %751 = vst [vmem:[%s172 + $0xa0] sm:$0xff] %v687
      %752 = vst [vmem:[%s172 + $0xa8] sm:$0xff] %v688
      %753 = vst [vmem:[%s172 + $0xb0] sm:$0xff] %v689
      %754 = vst [vmem:[%s172 + $0xb8] sm:$0xff] %v690
      %755 = vst [vmem:[%s172 + $0xc0] sm:$0xff] %v691
      %756 = vst [vmem:[%s172 + $0xc8] sm:$0xff] %v692
      %757 = vst [vmem:[%s172 + $0xd0] sm:$0xff] %v693
      %758 = vst [vmem:[%s172 + $0xd8] sm:$0xff] %v694
      %759 = vst [vmem:[%s172 + $0xe0] sm:$0xff] %v695
      %760 = vst [vmem:[%s172 + $0xe8] sm:$0xff] %v696
      %761 = vst [vmem:[%s172 + $0xf0] sm:$0xff] %v697
      %762 = vst [vmem:[%s172 + $0xf8] sm:$0xff] %v698
      %763 = vst [vmem:[%s172 + $0x100] sm:$0xff] %v699
      %764 = vst [vmem:[%s172 + $0x108] sm:$0xff] %v700
      %765 = vst [vmem:[%s172 + $0x110] sm:$0xff] %v701
      %766 = vst [vmem:[%s172 + $0x118] sm:$0xff] %v702
      %767 = vst [vmem:[%s172 + $0x120] sm:$0xff] %v703
      %768 = vst [vmem:[%s172 + $0x128] sm:$0xff] %v704
      %769 = vst [vmem:[%s172 + $0x130] sm:$0xff] %v705
      %770 = vst [vmem:[%s172 + $0x138] sm:$0xff] %v706
      %771 = vst [vmem:[%s172 + $0x140] sm:$0xff] %v707
      %772 = vst [vmem:[%s172 + $0x148] sm:$0xff] %v708
      %773 = vst [vmem:[%s172 + $0x150] sm:$0xff] %v709
      %774 = vst [vmem:[%s172 + $0x158] sm:$0xff] %v710
      %775 = vst [vmem:[%s172 + $0x160] sm:$0xff] %v711
      %776 = vst [vmem:[%s172 + $0x168] sm:$0xff] %v712
      %777 = vst [vmem:[%s172 + $0x170] sm:$0xff] %v713
      %778 = vst [vmem:[%s172 + $0x178] sm:$0xff] %v714
      %779 = vst [vmem:[%s172 + $0x180] sm:$0xff] %v715
      %780 = vst [vmem:[%s172 + $0x188] sm:$0xff] %v716
      %781 = vst [vmem:[%s172 + $0x190] sm:$0xff] %v717
      %782 = vst [vmem:[%s172 + $0x198] sm:$0xff] %v718
      %783 = vst [vmem:[%s172 + $0x1a0] sm:$0xff] %v719
      %784 = vst [vmem:[%s172 + $0x1a8] sm:$0xff] %v720
      %785 = vst [vmem:[%s172 + $0x1b0] sm:$0xff] %v721
      %786 = vst [vmem:[%s172 + $0x1b8] sm:$0xff] %v722
      %787 = vst [vmem:[%s172 + $0x1c0] sm:$0xff] %v723
      %788 = vst [vmem:[%s172 + $0x1c8] sm:$0xff] %v724
      %789 = vst [vmem:[%s172 + $0x1d0] sm:$0xff] %v725
      %790 = vst [vmem:[%s172 + $0x1d8] sm:$0xff] %v726
      %791 = vst [vmem:[%s172 + $0x1e0] sm:$0xff] %v727
      %792 = vst [vmem:[%s172 + $0x1e8] sm:$0xff] %v728
      %793 = vst [vmem:[%s172 + $0x1f0] sm:$0xff] %v729
      %794 = vst [vmem:[%s172 + $0x1f8] sm:$0xff] %v730
      %s795 = smul.u32 64, %s14
      %p796 = scmp.lt.s32.totalorder %s795, 255
      %s797 = scalar_select %p796, %s795, 255
      %s798 = smul.addr %s797, 8
      %s799 = scalar_lea.vmem %s3, %s798
      // Predicated region
      $region33: #{cnn_forward.3} parent=31 // pred_check
        %p800 = pneg %p100
      $region34: #{cnn_forward.3} parent=31 // pred_check_branch
        %802 = sbr.rel (%p800) target = $region36
      $region35: #{cnn_forward.3} parent=31 // pred_region
        %s803 = smul.u32 64, %s14
      $region36: #{cnn_forward.3} parent=31 // pred_fallthru
        _
    $region32: #{cnn_forward.3} parent=5 // pred_fallthru
      _
    %p804 = scmp.le.s32.totalorder 2, %s9
    // Predicated region
    $region37: #{cnn_forward.3} parent=5 // pred_check
      %p805 = pneg %p804
    $region38: #{cnn_forward.3} parent=5 // pred_check_branch
      %807 = sbr.rel (%p805) target = $region40
    $region39: #{cnn_forward.3} parent=5 // pred_region
      %s808 = ssub.s32 %s9, 2
      // Predicated region
      $region41: #{cnn_forward.3} parent=39 // pred_check
        %p809 = pneg %p106
      $region42: #{cnn_forward.3} parent=39 // pred_check_branch
        %811 = sbr.rel (%p809) target = $region44
      $region43: #{cnn_forward.3} parent=39 // pred_region
        %s812 = smul.u32 64, %s15
        %p813 = scmp.lt.s32.totalorder %s812, 255
        %s814 = scalar_select %p813, %s812, 255
        %s815 = smul.addr %s814, 8
        %s816 = scalar_lea.vmem %s3, %s815
      $region44: #{cnn_forward.3} parent=39 // pred_fallthru
        _
    $region40: #{cnn_forward.3} parent=5 // pred_fallthru
      _
  $region6: #{cnn_forward.3} parent=0 // loop_footer
    %s13 = sadd.s32 1, %s9
  $region7: #{cnn_forward.3} parent=0 // loop_footer_branch
    %8 = sbr.rel target = $region3
  $region8: #{cnn_forward.3} parent=0 // loop_exit
    _

// kernel: cnn_forward.4
$region0: #{cnn_forward.4}
  #allocation0 [shape = 'u32[]', space=smem, size = 0x4, offset = 0x4, fixed_abs, tag = 'smem constant byte address 0x4 - core index']
  #allocation1 [shape = 'u32[72,128]{1,0:T(1,128)}', space=vmem, size = 0x9000, scoped, tag = 'internal scratch']
  %s0 = inlined_call_operand.vmem [shape: bf16[392,128], index: 0, kind: input, shape index: {}]
  %s1 = inlined_call_operand.vmem [shape: bf16[128,128], index: 1, kind: input, shape index: {}]
  %s2 = inlined_call_operand.vmem [shape: f32[1,128], index: 2, kind: input, shape index: {}]
  %s3 = inlined_call_operand.vmem [shape: f32[392,128], index: 3, kind: output, shape index: {}]
  %s4 = sld [smem:[#allocation0]]
  $region22: #{cnn_forward.4} parent=0
    _
  %s6 = ssub.s32 1, %s4
  %s7 = scalar_select 0, %s6, %s4
  // Predicated region
  $region2: #{cnn_forward.4} parent=0 // pred_check
    _
  $region3: #{cnn_forward.4} parent=0 // pred_check_branch
    %9 = sbr.rel (0) target = $region5
  $region4: #{cnn_forward.4} parent=0 // pred_region
    _
  $region5: #{cnn_forward.4} parent=0 // pred_fallthru
    _
  // Predicated region
  $region6: #{cnn_forward.4} parent=0 // pred_check
    _
  $region7: #{cnn_forward.4} parent=0 // pred_check_branch
    %11 = sbr.rel (0) target = $region9
  $region8: #{cnn_forward.4} parent=0 // pred_region
    _
  $region9: #{cnn_forward.4} parent=0 // pred_fallthru
    _
  // Predicated region
  $region10: #{cnn_forward.4} parent=0 // pred_check
    _
  $region11: #{cnn_forward.4} parent=0 // pred_check_branch
    %13 = sbr.rel (0) target = $region13
  $region12: #{cnn_forward.4} parent=0 // pred_region
    _
  $region13: #{cnn_forward.4} parent=0 // pred_fallthru
    _
  %v14 = vld [vmem:[%s0] sm:$0xf]
  %v15 = vld [vmem:[%s0 + $0x4] sm:$0xf]
  %v16 = vld [vmem:[%s0 + $0x8] sm:$0xf]
  %v17 = vld [vmem:[%s0 + $0xc] sm:$0xf]
  %v18 = vld [vmem:[%s0 + $0x10] sm:$0xf]
  %v19 = vld [vmem:[%s0 + $0x14] sm:$0xf]
  %v20 = vld [vmem:[%s0 + $0x18] sm:$0xf]
  %v21 = vld [vmem:[%s0 + $0x1c] sm:$0xf]
  %v22 = vld [vmem:[%s0 + $0x20] sm:$0xf]
  %v23 = vld [vmem:[%s0 + $0x24] sm:$0xf]
  %v24 = vld [vmem:[%s0 + $0x28] sm:$0xf]
  %v25 = vld [vmem:[%s0 + $0x2c] sm:$0xf]
  %v26 = vld [vmem:[%s0 + $0x30] sm:$0xf]
  %v27 = vld [vmem:[%s0 + $0x34] sm:$0xf]
  %v28 = vld [vmem:[%s0 + $0x38] sm:$0xf]
  %v29 = vld [vmem:[%s0 + $0x3c] sm:$0xf]
  %v30 = vld [vmem:[%s0 + $0x40] sm:$0xf]
  %v31 = vld [vmem:[%s0 + $0x44] sm:$0xf]
  %v32 = vld [vmem:[%s0 + $0x48] sm:$0xf]
  %v33 = vld [vmem:[%s0 + $0x4c] sm:$0xf]
  %v34 = vld [vmem:[%s0 + $0x50] sm:$0xf]
  %v35 = vld [vmem:[%s0 + $0x54] sm:$0xf]
  %v36 = vld [vmem:[%s0 + $0x58] sm:$0xf]
  %v37 = vld [vmem:[%s0 + $0x5c] sm:$0xf]
  %v38 = vld [vmem:[%s0 + $0x60] sm:$0xf]
  %v39 = vld [vmem:[%s0 + $0x64] sm:$0xf]
  %v40 = vld [vmem:[%s0 + $0x68] sm:$0xf]
  %v41 = vld [vmem:[%s0 + $0x6c] sm:$0xf]
  %v42 = vld [vmem:[%s0 + $0x70] sm:$0xf]
  %v43 = vld [vmem:[%s0 + $0x74] sm:$0xf]
  %v44 = vld [vmem:[%s0 + $0x78] sm:$0xf]
  %v45 = vld [vmem:[%s0 + $0x7c] sm:$0xf]
  %v46 = vld [vmem:[%s0 + $0x80] sm:$0xf]
  %v47 = vld [vmem:[%s0 + $0x84] sm:$0xf]
  %v48 = vld [vmem:[%s0 + $0x88] sm:$0xf]
  %v49 = vld [vmem:[%s0 + $0x8c] sm:$0xf]
  %v50 = vld [vmem:[%s0 + $0x90] sm:$0xf]
  %v51 = vld [vmem:[%s0 + $0x94] sm:$0xf]
  %v52 = vld [vmem:[%s0 + $0x98] sm:$0xf]
  %v53 = vld [vmem:[%s0 + $0x9c] sm:$0xf]
  %v54 = vld [vmem:[%s0 + $0xa0] sm:$0xf]
  %v55 = vld [vmem:[%s0 + $0xa4] sm:$0xf]
  %v56 = vld [vmem:[%s0 + $0xa8] sm:$0xf]
  %v57 = vld [vmem:[%s0 + $0xac] sm:$0xf]
  %v58 = vld [vmem:[%s0 + $0xb0] sm:$0xf]
  %v59 = vld [vmem:[%s0 + $0xb4] sm:$0xf]
  %v60 = vld [vmem:[%s0 + $0xb8] sm:$0xf]
  %v61 = vld [vmem:[%s0 + $0xbc] sm:$0xf]
  %v62 = vld [vmem:[%s0 + $0xc0] sm:$0xf]
  %v63 = vld [vmem:[%s1] sm:$0xf]
  %v64 = vld [vmem:[%s1 + $0x4] sm:$0xf]
  %v65 = vld [vmem:[%s1 + $0x8] sm:$0xf]
  %v66 = vld [vmem:[%s1 + $0xc] sm:$0xf]
  %v67 = vld [vmem:[%s1 + $0x10] sm:$0xf]
  %v68 = vld [vmem:[%s1 + $0x14] sm:$0xf]
  %v69 = vld [vmem:[%s1 + $0x18] sm:$0xf]
  %v70 = vld [vmem:[%s1 + $0x1c] sm:$0xf]
  %v71 = vld [vmem:[%s1 + $0x20] sm:$0xf]
  %v72 = vld [vmem:[%s1 + $0x24] sm:$0xf]
  %v73 = vld [vmem:[%s1 + $0x28] sm:$0xf]
  %v74 = vld [vmem:[%s1 + $0x2c] sm:$0xf]
  %v75 = vld [vmem:[%s1 + $0x30] sm:$0xf]
  %v76 = vld [vmem:[%s1 + $0x34] sm:$0xf]
  %v77 = vld [vmem:[%s1 + $0x38] sm:$0xf]
  %v78 = vld [vmem:[%s1 + $0x3c] sm:$0xf]
  %v79 = vld [vmem:[%s2] sm:$0x1]
  %v81 = vperm.slane %v79, 0
  %v132 = vunpack.c.l.b16 %v14
  %v133 = vunpack.c.l.b16 %v15
  %v134 = vunpack.c.l.b16 %v16
  %v135 = vunpack.c.l.b16 %v17
  %v136 = vunpack.c.l.b16 %v18
  %v137 = vunpack.c.l.b16 %v19
  %v138 = vunpack.c.l.b16 %v20
  %v139 = vunpack.c.l.b16 %v21
  %v140 = vunpack.c.l.b16 %v22
  %v141 = vunpack.c.l.b16 %v23
  %v142 = vunpack.c.l.b16 %v24
  %v143 = vunpack.c.l.b16 %v25
  %v144 = vunpack.c.l.b16 %v26
  %v145 = vunpack.c.l.b16 %v27
  %v146 = vunpack.c.l.b16 %v28
  %v147 = vunpack.c.l.b16 %v29
  %v148 = vunpack.c.l.b16 %v30
  %v149 = vunpack.c.l.b16 %v31
  %v150 = vunpack.c.l.b16 %v32
  %v151 = vunpack.c.l.b16 %v33
  %v152 = vunpack.c.l.b16 %v34
  %v153 = vunpack.c.l.b16 %v35
  %v154 = vunpack.c.l.b16 %v36
  %v155 = vunpack.c.l.b16 %v37
  %v156 = vunpack.c.l.b16 %v38
  %v157 = vunpack.c.l.b16 %v39
  %v158 = vunpack.c.l.b16 %v40
  %v159 = vunpack.c.l.b16 %v41
  %v160 = vunpack.c.l.b16 %v42
  %v161 = vunpack.c.l.b16 %v43
  %v162 = vunpack.c.l.b16 %v44
  %v163 = vunpack.c.l.b16 %v45
  %v164 = vunpack.c.l.b16 %v46
  %v165 = vunpack.c.l.b16 %v47
  %v166 = vunpack.c.l.b16 %v48
  %v167 = vunpack.c.l.b16 %v49
  %v168 = vunpack.c.l.b16 %v50
  %v169 = vunpack.c.l.b16 %v51
  %v170 = vunpack.c.l.b16 %v52
  %v171 = vunpack.c.l.b16 %v53
  %v172 = vunpack.c.l.b16 %v54
  %v173 = vunpack.c.l.b16 %v55
  %v174 = vunpack.c.l.b16 %v56
  %v175 = vunpack.c.l.b16 %v57
  %v176 = vunpack.c.l.b16 %v58
  %v177 = vunpack.c.l.b16 %v59
  %v178 = vunpack.c.l.b16 %v60
  %v179 = vunpack.c.l.b16 %v61
  %v180 = vunpack.c.l.b16 %v62
  %v181 = vpack.c.b16 %v133, %v132
  %v182 = vpack.c.b16 %v135, %v134
  %v183 = vpack.c.b16 %v137, %v136
  %v184 = vpack.c.b16 %v139, %v138
  %v185 = vpack.c.b16 %v141, %v140
  %v186 = vpack.c.b16 %v143, %v142
  %v187 = vpack.c.b16 %v145, %v144
  %v188 = vpack.c.b16 %v147, %v146
  %v189 = vpack.c.b16 %v149, %v148
  %v190 = vpack.c.b16 %v151, %v150
  %v191 = vpack.c.b16 %v153, %v152
  %v192 = vpack.c.b16 %v155, %v154
  %v193 = vpack.c.b16 %v157, %v156
  %v194 = vpack.c.b16 %v159, %v158
  %v195 = vpack.c.b16 %v161, %v160
  %v196 = vpack.c.b16 %v163, %v162
  %v197 = vpack.c.b16 %v165, %v164
  %v198 = vpack.c.b16 %v167, %v166
  %v199 = vpack.c.b16 %v169, %v168
  %v200 = vpack.c.b16 %v171, %v170
  %v201 = vpack.c.b16 %v173, %v172
  %v202 = vpack.c.b16 %v175, %v174
  %v203 = vpack.c.b16 %v177, %v176
  %v204 = vpack.c.b16 %v179, %v178
  %v205 = vpack.c.b16 %v180, %v180
  %v247 = vunpack.c.l.b16 %v63
  %v248 = vunpack.c.l.b16 %v64
  %v249 = vunpack.c.l.b16 %v65
  %v250 = vunpack.c.l.b16 %v66
  %v251 = vunpack.c.l.b16 %v67
  %v252 = vunpack.c.l.b16 %v68
  %v253 = vunpack.c.l.b16 %v69
  %v254 = vunpack.c.l.b16 %v70
  %v255 = vunpack.c.l.b16 %v71
  %v256 = vunpack.c.l.b16 %v72
  %v257 = vunpack.c.l.b16 %v73
  %v258 = vunpack.c.l.b16 %v74
  %v259 = vunpack.c.l.b16 %v75
  %v260 = vunpack.c.l.b16 %v76
  %v261 = vunpack.c.l.b16 %v77
  %v262 = vunpack.c.l.b16 %v78
  %v263 = vpack.c.b16 %v248, %v247
  %v264 = vpack.c.b16 %v250, %v249
  %v265 = vpack.c.b16 %v252, %v251
  %v266 = vpack.c.b16 %v254, %v253
  %v267 = vpack.c.b16 %v256, %v255
  %v268 = vpack.c.b16 %v258, %v257
  %v269 = vpack.c.b16 %v260, %v259
  %v270 = vpack.c.b16 %v262, %v261
  %279 = vmatpush.bf16.msra.mxu0 %v270
  %280 = vmatpush.bf16.msra.mxu0 %v269
  %281 = vmatpush.bf16.msra.mxu0 %v268
  %282 = vmatpush.bf16.msra.mxu0 %v267
  %283 = vmatpush.bf16.msra.mxu0 %v266
  %284 = vmatpush.bf16.msra.mxu0 %v265
  %285 = vmatpush.bf16.msra.mxu0 %v264
  %286 = vmatpush.bf16.msra.mxu0 %v263
  %287 = vmatmul.bf16.gmra.mxu0 %v181
  %v288 = vpop.f32.mrf.mxu0
  %v289 = vadd.f32 %v81, %v288
  %v290 = vpop.f32.mrf.mxu0
  %v291 = vadd.f32 %v81, %v290
  %292 = vmatmul.bf16.gmra.mxu0 %v182
  %v293 = vpop.f32.mrf.mxu0
  %v294 = vadd.f32 %v81, %v293
  %v295 = vpop.f32.mrf.mxu0
  %v296 = vadd.f32 %v81, %v295
  %297 = vmatmul.bf16.gmra.mxu0 %v183
  %v298 = vpop.f32.mrf.mxu0
  %v299 = vadd.f32 %v81, %v298
  %v300 = vpop.f32.mrf.mxu0
  %v301 = vadd.f32 %v81, %v300
  %302 = vmatmul.bf16.gmra.mxu0 %v184
  %v303 = vpop.f32.mrf.mxu0
  %v304 = vadd.f32 %v81, %v303
  %v305 = vpop.f32.mrf.mxu0
  %v306 = vadd.f32 %v81, %v305
  %307 = vmatmul.bf16.gmra.mxu0 %v185
  %v308 = vpop.f32.mrf.mxu0
  %v309 = vadd.f32 %v81, %v308
  %v310 = vpop.f32.mrf.mxu0
  %v311 = vadd.f32 %v81, %v310
  %312 = vmatmul.bf16.gmra.mxu0 %v186
  %v313 = vpop.f32.mrf.mxu0
  %v314 = vadd.f32 %v81, %v313
  %v315 = vpop.f32.mrf.mxu0
  %v316 = vadd.f32 %v81, %v315
  %317 = vmatmul.bf16.gmra.mxu0 %v187
  %v318 = vpop.f32.mrf.mxu0
  %v319 = vadd.f32 %v81, %v318
  %v320 = vpop.f32.mrf.mxu0
  %v321 = vadd.f32 %v81, %v320
  %322 = vmatmul.bf16.gmra.mxu0 %v188
  %v323 = vpop.f32.mrf.mxu0
  %v324 = vadd.f32 %v81, %v323
  %v325 = vpop.f32.mrf.mxu0
  %v326 = vadd.f32 %v81, %v325
  %327 = vmatmul.bf16.gmra.mxu0 %v189
  %v328 = vpop.f32.mrf.mxu0
  %v329 = vadd.f32 %v81, %v328
  %v330 = vpop.f32.mrf.mxu0
  %v331 = vadd.f32 %v81, %v330
  %332 = vmatmul.bf16.gmra.mxu0 %v190
  %v333 = vpop.f32.mrf.mxu0
  %v334 = vadd.f32 %v81, %v333
  %v335 = vpop.f32.mrf.mxu0
  %v336 = vadd.f32 %v81, %v335
  %337 = vmatmul.bf16.gmra.mxu0 %v191
  %v338 = vpop.f32.mrf.mxu0
  %v339 = vadd.f32 %v81, %v338
  %v340 = vpop.f32.mrf.mxu0
  %v341 = vadd.f32 %v81, %v340
  %342 = vmatmul.bf16.gmra.mxu0 %v192
  %v343 = vpop.f32.mrf.mxu0
  %v344 = vadd.f32 %v81, %v343
  %v345 = vpop.f32.mrf.mxu0
  %v346 = vadd.f32 %v81, %v345
  %347 = vmatmul.bf16.gmra.mxu0 %v193
  %v348 = vpop.f32.mrf.mxu0
  %v349 = vadd.f32 %v81, %v348
  %v350 = vpop.f32.mrf.mxu0
  %v351 = vadd.f32 %v81, %v350
  %352 = vmatmul.bf16.gmra.mxu0 %v194
  %v353 = vpop.f32.mrf.mxu0
  %v354 = vadd.f32 %v81, %v353
  %v355 = vpop.f32.mrf.mxu0
  %v356 = vadd.f32 %v81, %v355
  %357 = vmatmul.bf16.gmra.mxu0 %v195
  %v358 = vpop.f32.mrf.mxu0
  %v359 = vadd.f32 %v81, %v358
  %v360 = vpop.f32.mrf.mxu0
  %v361 = vadd.f32 %v81, %v360
  %362 = vmatmul.bf16.gmra.mxu0 %v196
  %v363 = vpop.f32.mrf.mxu0
  %v364 = vadd.f32 %v81, %v363
  %v365 = vpop.f32.mrf.mxu0
  %v366 = vadd.f32 %v81, %v365
  %367 = vmatmul.bf16.gmra.mxu0 %v197
  %v368 = vpop.f32.mrf.mxu0
  %v369 = vadd.f32 %v81, %v368
  %v370 = vpop.f32.mrf.mxu0
  %v371 = vadd.f32 %v81, %v370
  %372 = vmatmul.bf16.gmra.mxu0 %v198
  %v373 = vpop.f32.mrf.mxu0
  %v374 = vadd.f32 %v81, %v373
  %v375 = vpop.f32.mrf.mxu0
  %v376 = vadd.f32 %v81, %v375
  %377 = vmatmul.bf16.gmra.mxu0 %v199
  %v378 = vpop.f32.mrf.mxu0
  %v379 = vadd.f32 %v81, %v378
  %v380 = vpop.f32.mrf.mxu0
  %v381 = vadd.f32 %v81, %v380
  %382 = vmatmul.bf16.gmra.mxu0 %v200
  %v383 = vpop.f32.mrf.mxu0
  %v384 = vadd.f32 %v81, %v383
  %v385 = vpop.f32.mrf.mxu0
  %v386 = vadd.f32 %v81, %v385
  %387 = vmatmul.bf16.gmra.mxu0 %v201
  %v388 = vpop.f32.mrf.mxu0
  %v389 = vadd.f32 %v81, %v388
  %v390 = vpop.f32.mrf.mxu0
  %v391 = vadd.f32 %v81, %v390
  %392 = vmatmul.bf16.gmra.mxu0 %v202
  %v393 = vpop.f32.mrf.mxu0
  %v394 = vadd.f32 %v81, %v393
  %v395 = vpop.f32.mrf.mxu0
  %v396 = vadd.f32 %v81, %v395
  %397 = vmatmul.bf16.gmra.mxu0 %v203
  %v398 = vpop.f32.mrf.mxu0
  %v399 = vadd.f32 %v81, %v398
  %v400 = vpop.f32.mrf.mxu0
  %v401 = vadd.f32 %v81, %v400
  %402 = vmatmul.bf16.gmra.mxu0 %v204
  %v403 = vpop.f32.mrf.mxu0
  %v404 = vadd.f32 %v81, %v403
  %v405 = vpop.f32.mrf.mxu0
  %v406 = vadd.f32 %v81, %v405
  %407 = vmatmul.bf16.gmra.mxu0 %v205
  %v408 = vpop.f32.mrf.mxu0
  %v409 = vadd.f32 %v81, %v408
  %v410 = vpop.f32.mrf.mxu0
  %411 = vdwg.mxu0
  %v412 = vmax.f32 %v289, 0.0
  %v413 = vmax.f32 %v291, 0.0
  %v414 = vmax.f32 %v294, 0.0
  %v415 = vmax.f32 %v296, 0.0
  %v416 = vmax.f32 %v299, 0.0
  %v417 = vmax.f32 %v301, 0.0
  %v418 = vmax.f32 %v304, 0.0
  %v419 = vmax.f32 %v306, 0.0
  %v420 = vmax.f32 %v309, 0.0
  %v421 = vmax.f32 %v311, 0.0
  %v422 = vmax.f32 %v314, 0.0
  %v423 = vmax.f32 %v316, 0.0
  %v424 = vmax.f32 %v319, 0.0
  %v425 = vmax.f32 %v321, 0.0
  %v426 = vmax.f32 %v324, 0.0
  %v427 = vmax.f32 %v326, 0.0
  %v428 = vmax.f32 %v329, 0.0
  %v429 = vmax.f32 %v331, 0.0
  %v430 = vmax.f32 %v334, 0.0
  %v431 = vmax.f32 %v336, 0.0
  %v432 = vmax.f32 %v339, 0.0
  %v433 = vmax.f32 %v341, 0.0
  %v434 = vmax.f32 %v344, 0.0
  %v435 = vmax.f32 %v346, 0.0
  %v436 = vmax.f32 %v349, 0.0
  %v437 = vmax.f32 %v351, 0.0
  %v438 = vmax.f32 %v354, 0.0
  %v439 = vmax.f32 %v356, 0.0
  %v440 = vmax.f32 %v359, 0.0
  %v441 = vmax.f32 %v361, 0.0
  %v442 = vmax.f32 %v364, 0.0
  %v443 = vmax.f32 %v366, 0.0
  %v444 = vmax.f32 %v369, 0.0
  %v445 = vmax.f32 %v371, 0.0
  %v446 = vmax.f32 %v374, 0.0
  %v447 = vmax.f32 %v376, 0.0
  %v448 = vmax.f32 %v379, 0.0
  %v449 = vmax.f32 %v381, 0.0
  %v450 = vmax.f32 %v384, 0.0
  %v451 = vmax.f32 %v386, 0.0
  %v452 = vmax.f32 %v389, 0.0
  %v453 = vmax.f32 %v391, 0.0
  %v454 = vmax.f32 %v394, 0.0
  %v455 = vmax.f32 %v396, 0.0
  %v456 = vmax.f32 %v399, 0.0
  %v457 = vmax.f32 %v401, 0.0
  %v458 = vmax.f32 %v404, 0.0
  %v459 = vmax.f32 %v406, 0.0
  %v460 = vmax.f32 %v409, 0.0
  %461 = vst [vmem:[%s3] sm:$0xff] %v412
  %462 = vst [vmem:[%s3 + $0x8] sm:$0xff] %v413
  %463 = vst [vmem:[%s3 + $0x10] sm:$0xff] %v414
  %464 = vst [vmem:[%s3 + $0x18] sm:$0xff] %v415
  %465 = vst [vmem:[%s3 + $0x20] sm:$0xff] %v416
  %466 = vst [vmem:[%s3 + $0x28] sm:$0xff] %v417
  %467 = vst [vmem:[%s3 + $0x30] sm:$0xff] %v418
  %468 = vst [vmem:[%s3 + $0x38] sm:$0xff] %v419
  %469 = vst [vmem:[%s3 + $0x40] sm:$0xff] %v420
  %470 = vst [vmem:[%s3 + $0x48] sm:$0xff] %v421
  %471 = vst [vmem:[%s3 + $0x50] sm:$0xff] %v422
  %472 = vst [vmem:[%s3 + $0x58] sm:$0xff] %v423
  %473 = vst [vmem:[%s3 + $0x60] sm:$0xff] %v424
  %474 = vst [vmem:[%s3 + $0x68] sm:$0xff] %v425
  %475 = vst [vmem:[%s3 + $0x70] sm:$0xff] %v426
  %476 = vst [vmem:[%s3 + $0x78] sm:$0xff] %v427
  %477 = vst [vmem:[%s3 + $0x80] sm:$0xff] %v428
  %478 = vst [vmem:[%s3 + $0x88] sm:$0xff] %v429
  %479 = vst [vmem:[%s3 + $0x90] sm:$0xff] %v430
  %480 = vst [vmem:[%s3 + $0x98] sm:$0xff] %v431
  %481 = vst [vmem:[%s3 + $0xa0] sm:$0xff] %v432
  %482 = vst [vmem:[%s3 + $0xa8] sm:$0xff] %v433
  %483 = vst [vmem:[%s3 + $0xb0] sm:$0xff] %v434
  %484 = vst [vmem:[%s3 + $0xb8] sm:$0xff] %v435
  %485 = vst [vmem:[%s3 + $0xc0] sm:$0xff] %v436
  %486 = vst [vmem:[%s3 + $0xc8] sm:$0xff] %v437
  %487 = vst [vmem:[%s3 + $0xd0] sm:$0xff] %v438
  %488 = vst [vmem:[%s3 + $0xd8] sm:$0xff] %v439
  %489 = vst [vmem:[%s3 + $0xe0] sm:$0xff] %v440
  %490 = vst [vmem:[%s3 + $0xe8] sm:$0xff] %v441
  %491 = vst [vmem:[%s3 + $0xf0] sm:$0xff] %v442
  %492 = vst [vmem:[%s3 + $0xf8] sm:$0xff] %v443
  %493 = vst [vmem:[%s3 + $0x100] sm:$0xff] %v444
  %494 = vst [vmem:[%s3 + $0x108] sm:$0xff] %v445
  %495 = vst [vmem:[%s3 + $0x110] sm:$0xff] %v446
  %496 = vst [vmem:[%s3 + $0x118] sm:$0xff] %v447
  %497 = vst [vmem:[%s3 + $0x120] sm:$0xff] %v448
  %498 = vst [vmem:[%s3 + $0x128] sm:$0xff] %v449
  %499 = vst [vmem:[%s3 + $0x130] sm:$0xff] %v450
  %500 = vst [vmem:[%s3 + $0x138] sm:$0xff] %v451
  %501 = vst [vmem:[%s3 + $0x140] sm:$0xff] %v452
  %502 = vst [vmem:[%s3 + $0x148] sm:$0xff] %v453
  %503 = vst [vmem:[%s3 + $0x150] sm:$0xff] %v454
  %504 = vst [vmem:[%s3 + $0x158] sm:$0xff] %v455
  %505 = vst [vmem:[%s3 + $0x160] sm:$0xff] %v456
  %506 = vst [vmem:[%s3 + $0x168] sm:$0xff] %v457
  %507 = vst [vmem:[%s3 + $0x170] sm:$0xff] %v458
  %508 = vst [vmem:[%s3 + $0x178] sm:$0xff] %v459
  %509 = vst [vmem:[%s3 + $0x180] sm:$0xff] %v460
  // Predicated region
  $region14: #{cnn_forward.4} parent=0 // pred_check
    _
  $region15: #{cnn_forward.4} parent=0 // pred_check_branch
    %511 = sbr.rel (0) target = $region17
  $region16: #{cnn_forward.4} parent=0 // pred_region
    _
  $region17: #{cnn_forward.4} parent=0 // pred_fallthru
    _
  // Predicated region
  $region18: #{cnn_forward.4} parent=0 // pred_check
    _
  $region19: #{cnn_forward.4} parent=0 // pred_check_branch
    %513 = sbr.rel (0) target = $region21
  $region20: #{cnn_forward.4} parent=0 // pred_region
    _
  $region21: #{cnn_forward.4} parent=0 // pred_fallthru
    _

// kernel: cnn_forward.5
$region0: #{cnn_forward.5}
  #allocation0 [shape = 'u32[]', space=smem, size = 0x4, offset = 0x4, fixed_abs, tag = 'smem constant byte address 0x4 - core index']
  #allocation1 [shape = 'u32[72,128]{1,0:T(1,128)}', space=vmem, size = 0x9000, scoped, tag = 'internal scratch']
  %s0 = inlined_call_operand.vmem [shape: bf16[8,256], index: 0, kind: input, shape index: {}]
  %s1 = inlined_call_operand.vmem [shape: bf16[256,128], index: 1, kind: input, shape index: {}]
  %s2 = inlined_call_operand.vmem [shape: f32[1,128], index: 2, kind: input, shape index: {}]
  %s3 = inlined_call_operand.vmem [shape: f32[8,128], index: 3, kind: output, shape index: {}]
  %s4 = sld [smem:[#allocation0]]
  $region22: #{cnn_forward.5} parent=0
    _
  %s6 = ssub.s32 1, %s4
  %s7 = scalar_select 0, %s6, %s4
  // Predicated region
  $region2: #{cnn_forward.5} parent=0 // pred_check
    _
  $region3: #{cnn_forward.5} parent=0 // pred_check_branch
    %9 = sbr.rel (0) target = $region5
  $region4: #{cnn_forward.5} parent=0 // pred_region
    _
  $region5: #{cnn_forward.5} parent=0 // pred_fallthru
    _
  // Predicated region
  $region6: #{cnn_forward.5} parent=0 // pred_check
    _
  $region7: #{cnn_forward.5} parent=0 // pred_check_branch
    %11 = sbr.rel (0) target = $region9
  $region8: #{cnn_forward.5} parent=0 // pred_region
    _
  $region9: #{cnn_forward.5} parent=0 // pred_fallthru
    _
  // Predicated region
  $region10: #{cnn_forward.5} parent=0 // pred_check
    _
  $region11: #{cnn_forward.5} parent=0 // pred_check_branch
    %13 = sbr.rel (0) target = $region13
  $region12: #{cnn_forward.5} parent=0 // pred_region
    _
  $region13: #{cnn_forward.5} parent=0 // pred_fallthru
    _
  %v14 = vld [vmem:[%s0] sm:$0xff]
  %v15 = vld [vmem:[%s1] sm:$0xf]
  %v16 = vld [vmem:[%s1 + $0x4] sm:$0xf]
  %v17 = vld [vmem:[%s1 + $0x8] sm:$0xf]
  %v18 = vld [vmem:[%s1 + $0xc] sm:$0xf]
  %v19 = vld [vmem:[%s1 + $0x10] sm:$0xf]
  %v20 = vld [vmem:[%s1 + $0x14] sm:$0xf]
  %v21 = vld [vmem:[%s1 + $0x18] sm:$0xf]
  %v22 = vld [vmem:[%s1 + $0x1c] sm:$0xf]
  %v23 = vld [vmem:[%s1 + $0x20] sm:$0xf]
  %v24 = vld [vmem:[%s1 + $0x24] sm:$0xf]
  %v25 = vld [vmem:[%s1 + $0x28] sm:$0xf]
  %v26 = vld [vmem:[%s1 + $0x2c] sm:$0xf]
  %v27 = vld [vmem:[%s1 + $0x30] sm:$0xf]
  %v28 = vld [vmem:[%s1 + $0x34] sm:$0xf]
  %v29 = vld [vmem:[%s1 + $0x38] sm:$0xf]
  %v30 = vld [vmem:[%s1 + $0x3c] sm:$0xf]
  %v31 = vld [vmem:[%s1 + $0x40] sm:$0xf]
  %v32 = vld [vmem:[%s1 + $0x44] sm:$0xf]
  %v33 = vld [vmem:[%s1 + $0x48] sm:$0xf]
  %v34 = vld [vmem:[%s1 + $0x4c] sm:$0xf]
  %v35 = vld [vmem:[%s1 + $0x50] sm:$0xf]
  %v36 = vld [vmem:[%s1 + $0x54] sm:$0xf]
  %v37 = vld [vmem:[%s1 + $0x58] sm:$0xf]
  %v38 = vld [vmem:[%s1 + $0x5c] sm:$0xf]
  %v39 = vld [vmem:[%s1 + $0x60] sm:$0xf]
  %v40 = vld [vmem:[%s1 + $0x64] sm:$0xf]
  %v41 = vld [vmem:[%s1 + $0x68] sm:$0xf]
  %v42 = vld [vmem:[%s1 + $0x6c] sm:$0xf]
  %v43 = vld [vmem:[%s1 + $0x70] sm:$0xf]
  %v44 = vld [vmem:[%s1 + $0x74] sm:$0xf]
  %v45 = vld [vmem:[%s1 + $0x78] sm:$0xf]
  %v46 = vld [vmem:[%s1 + $0x7c] sm:$0xf]
  %v47 = vld [vmem:[%s2] sm:$0x1]
  %v49 = vperm.slane %v47, 0
  %v52 = vunpack.c.l.b16 %v14
  %v53 = vunpack.c.h.b16 %v14
  %v54 = vpack.c.b16 %v52, %v52
  %v55 = vpack.c.b16 %v53, %v53
  %v90 = vunpack.c.l.b16 %v15
  %v91 = vunpack.c.l.b16 %v16
  %v92 = vunpack.c.l.b16 %v17
  %v93 = vunpack.c.l.b16 %v18
  %v94 = vunpack.c.l.b16 %v19
  %v95 = vunpack.c.l.b16 %v20
  %v96 = vunpack.c.l.b16 %v21
  %v97 = vunpack.c.l.b16 %v22
  %v98 = vunpack.c.l.b16 %v23
  %v99 = vunpack.c.l.b16 %v24
  %v100 = vunpack.c.l.b16 %v25
  %v101 = vunpack.c.l.b16 %v26
  %v102 = vunpack.c.l.b16 %v27
  %v103 = vunpack.c.l.b16 %v28
  %v104 = vunpack.c.l.b16 %v29
  %v105 = vunpack.c.l.b16 %v30
  %v106 = vunpack.c.l.b16 %v31
  %v107 = vunpack.c.l.b16 %v32
  %v108 = vunpack.c.l.b16 %v33
  %v109 = vunpack.c.l.b16 %v34
  %v110 = vunpack.c.l.b16 %v35
  %v111 = vunpack.c.l.b16 %v36
  %v112 = vunpack.c.l.b16 %v37
  %v113 = vunpack.c.l.b16 %v38
  %v114 = vunpack.c.l.b16 %v39
  %v115 = vunpack.c.l.b16 %v40
  %v116 = vunpack.c.l.b16 %v41
  %v117 = vunpack.c.l.b16 %v42
  %v118 = vunpack.c.l.b16 %v43
  %v119 = vunpack.c.l.b16 %v44
  %v120 = vunpack.c.l.b16 %v45
  %v121 = vunpack.c.l.b16 %v46
  %v122 = vpack.c.b16 %v91, %v90
  %v123 = vpack.c.b16 %v93, %v92
  %v124 = vpack.c.b16 %v95, %v94
  %v125 = vpack.c.b16 %v97, %v96
  %v126 = vpack.c.b16 %v99, %v98
  %v127 = vpack.c.b16 %v101, %v100
  %v128 = vpack.c.b16 %v103, %v102
  %v129 = vpack.c.b16 %v105, %v104
  %v130 = vpack.c.b16 %v107, %v106
  %v131 = vpack.c.b16 %v109, %v108
  %v132 = vpack.c.b16 %v111, %v110
  %v133 = vpack.c.b16 %v113, %v112
  %v134 = vpack.c.b16 %v115, %v114
  %v135 = vpack.c.b16 %v117, %v116
  %v136 = vpack.c.b16 %v119, %v118
  %v137 = vpack.c.b16 %v121, %v120
  %154 = vmatpush.bf16.msra.mxu0 %v129
  %155 = vmatpush.bf16.msra.mxu0 %v128
  %156 = vmatpush.bf16.msra.mxu0 %v127
  %157 = vmatpush.bf16.msra.mxu0 %v126
  %158 = vmatpush.bf16.msra.mxu0 %v125
  %159 = vmatpush.bf16.msra.mxu0 %v124
  %160 = vmatpush.bf16.msra.mxu0 %v123
  %161 = vmatpush.bf16.msra.mxu0 %v122
  %162 = vmatmul.bf16.gmra.mxu0 %v54
  %v163 = vpop.f32.mrf.mxu0
  %v164 = vadd.f32 %v49, %v163
  %v165 = vpop.f32.mrf.mxu0
  %166 = vdwg.mxu0
  %167 = vmatpush.bf16.msra.mxu0 %v137
  %168 = vmatpush.bf16.msra.mxu0 %v136
  %169 = vmatpush.bf16.msra.mxu0 %v135
  %170 = vmatpush.bf16.msra.mxu0 %v134
  %171 = vmatpush.bf16.msra.mxu0 %v133
  %172 = vmatpush.bf16.msra.mxu0 %v132
  %173 = vmatpush.bf16.msra.mxu0 %v131
  %174 = vmatpush.bf16.msra.mxu0 %v130
  %175 = vmatmul.bf16.gmra.mxu0 %v55
  %v176 = vpop.f32.mrf.mxu0
  %v177 = vadd.f32 %v164, %v176
  %v178 = vpop.f32.mrf.mxu0
  %179 = vdwg.mxu0
  %180 = vst [vmem:[%s3] sm:$0xff] %v177
  // Predicated region
  $region14: #{cnn_forward.5} parent=0 // pred_check
    _
  $region15: #{cnn_forward.5} parent=0 // pred_check_branch
    %182 = sbr.rel (0) target = $region17
  $region16: #{cnn_forward.5} parent=0 // pred_region
    _
  $region17: #{cnn_forward.5} parent=0 // pred_fallthru
    _
  // Predicated region
  $region18: #{cnn_forward.5} parent=0 // pred_check
    _
  $region19: #{cnn_forward.5} parent=0 // pred_check_branch
    %184 = sbr.rel (0) target = $region21
  $region20: #{cnn_forward.5} parent=0 // pred_region
    _
  $region21: #{cnn_forward.5} parent=0 // pred_fallthru
    _

</llo_original>
